<compile_context>
chip_gen: v7x
topology: tpu7x:2x2x1
jax: 0.10.0
libtpu: 0.0.40
codegen_flags: <defaults>
</compile_context>

<pallas_src>
import functools

import jax
import jax.numpy as jnp
from jax import lax
from jax.experimental import pallas as pl
from jax.experimental.pallas import tpu as pltpu

# Layer widths implied by model2.__init__ (action_space appended at build time).
LAYER_DIMS = [3, 6, 12, 24, 8, 4]

SUB_ROWS = 256         # rows per inner chunk (keeps the 6-layer body's live vregs well < 64)
MAX_TILE_ROWS = 4096   # rows per grid step: ~16x fewer grid steps than the old 512-row cap
MIN_PALLAS_BATCH = 256 # below this the pallas_call fixed overhead dominates -> XLA fallback


def _cdiv(a, b):
    return -(-a // b)


def _choose_tiling(batch):
    """Pick (tile_rows, n_steps): tile is a multiple of SUB_ROWS; n_steps even (>=2) when
    the batch allows it, so both v7x TensorCores get balanced work."""
    chunks = _cdiv(batch, SUB_ROWS)
    n_steps = _cdiv(chunks, MAX_TILE_ROWS // SUB_ROWS)
    if n_steps == 1 and chunks >= 2:
        n_steps = 2                      # second TensorCore / pipelining
    if n_steps > 1 and n_steps % 2:
        n_steps += 1                     # balanced split across 2 cores
    tile = _cdiv(chunks, n_steps) * SUB_ROWS
    return tile, n_steps


def _mlp_kernel(*refs, n_layers, sub):
    """Fused 6-layer MLP on one batch tile.

    refs = (x_ref, w1, b1, ..., wn, bn, out_ref)
      x_ref:   (tile, 3)            f32
      w_i:     (d_in, d_out)        bf16   (pre-transposed, full natural shape)
      b_i:     (1, d_out)           f32
      out_ref: (tile, action_space) f32
    ReLU after every layer except the final `policy` layer; dropout is identity (eval).
    """
    x_ref = refs[0]
    out_ref = refs[-1]
    w_refs = refs[1:1 + 2 * n_layers:2]
    b_refs = refs[2:2 + 2 * n_layers:2]

    tile_rows = x_ref.shape[0]
    n_chunks = tile_rows // sub

    # Tiny parameters: load once per grid step, reuse for every sub-chunk.
    ws = [w[...] for w in w_refs]          # bf16 (d_in, d_out)
    bs = [b[...] for b in b_refs]          # f32  (1, d_out)

    def chunk_body(c, carry):
        off = pl.multiple_of(c * sub, sub)
        h = x_ref[pl.ds(off, sub), :]                       # (sub, 3) f32
        for i in range(n_layers):
            z = jnp.dot(h.astype(jnp.bfloat16), ws[i],
                        preferred_element_type=jnp.float32) + bs[i]
            h = z if i == n_layers - 1 else jnp.maximum(z, 0.0)   # no ReLU on policy layer
        # TODO(synk): training-mode F.dropout would need pltpu.prng_seed /
        # pltpu.prng_random_bits masks; eval-mode forward (dropout == identity) only.
        out_ref[pl.ds(off, sub), :] = h.astype(out_ref.dtype)
        return carry

    lax.fori_loop(0, n_chunks, chunk_body, 0)


def prepare_params(params):
    """One-time parameter prep (hoisted out of the per-call path).

    PyTorch layout (out, in) f32 weights -> (in, out) bf16; biases -> (1, out) f32.
    """
    prepped = []
    for w, b in params:
        w = jnp.asarray(w, jnp.float32)
        b = jnp.asarray(b, jnp.float32)
        prepped.append((w.T.astype(jnp.bfloat16), b.reshape(1, -1)))
    return prepped


def _small_batch_forward(x, prepared_params):
    """Tiny batches: let XLA fuse it (same bf16-weight numerics as the kernel)."""
    h = x
    n = len(prepared_params)
    for i, (w_t, b) in enumerate(prepared_params):
        h = jnp.dot(h.astype(jnp.bfloat16), w_t,
                    preferred_element_type=jnp.float32) + b
        if i < n - 1:
            h = jnp.maximum(h, 0.0)
    return h


def mlp_forward(x, prepared_params):
    """model2 eval-mode forward as a single Pallas kernel.

    x: (B, 3) float32; prepared_params: output of prepare_params().
    Returns (B, action_space) float32.
    """
    batch, in_dim = x.shape
    n_layers = len(prepared_params)
    action_space = prepared_params[-1][0].shape[1]

    if batch < MIN_PALLAS_BATCH:
        return _small_batch_forward(x, prepared_params)

    tile, n_steps = _choose_tiling(batch)
    b_pad = tile * n_steps
    x_in = jnp.pad(x, ((0, b_pad - batch), (0, 0))) if b_pad != batch else x

    flat_params = []
    in_specs = [pl.BlockSpec((tile, in_dim), lambda i: (i, 0))]
    for w_t, b in prepared_params:
        flat_params += [w_t, b]
        in_specs += [pl.BlockSpec(w_t.shape, lambda i: (0, 0)),
                     pl.BlockSpec(b.shape, lambda i: (0, 0))]

    kernel = functools.partial(_mlp_kernel, n_layers=n_layers,
                               sub=min(SUB_ROWS, tile))

    out = pl.pallas_call(
        kernel,
        out_shape=jax.ShapeDtypeStruct((b_pad, action_space), jnp.float32),
        grid_spec=pltpu.PrefetchScalarGridSpec(
            num_scalar_prefetch=0,
            grid=(n_steps,),
            in_specs=in_specs,
            out_specs=pl.BlockSpec((tile, action_space), lambda i: (i, 0)),
        ),
        compiler_params=pltpu.CompilerParams(
            dimension_semantics=("parallel",),
        ),
    )(x_in, *flat_params)

    return out[:batch] if b_pad != batch else out


def init_params(key, action_space):
    """Deterministic init mirroring the Linear layer shapes of model2 (PyTorch convention)."""
    dims = LAYER_DIMS + [action_space]
    params = []
    for i in range(len(dims) - 1):
        fan_in, fan_out = dims[i], dims[i + 1]
        key, kw, kb = jax.random.split(key, 3)
        bound = 1.0 / (fan_in ** 0.5)
        w = jax.random.uniform(kw, (fan_out, fan_in), jnp.float32, -bound, bound)
        b = jax.random.uniform(kb, (fan_out,), jnp.float32, -bound, bound)
        params.append((w, b))
    return params


def reference_forward(x, params, *, emulate_bf16=False):
    """Pure-JAX reference of the same forward pass (f32, PyTorch-layout weights).

    emulate_bf16=True applies the same bf16 rounding of activations/weights that the
    kernel uses before each matmul (accumulation stays f32)."""
    h = x
    n = len(params)
    for i, (w, b) in enumerate(params):
        if emulate_bf16:
            h = h.astype(jnp.bfloat16).astype(jnp.float32)
            w = w.astype(jnp.bfloat16).astype(jnp.float32)
        h = jnp.dot(h, w.T, precision=lax.Precision.HIGHEST) + b
        if i < n - 1:
            h = jnp.maximum(h, 0.0)
    return h


if __name__ == "__main__":
    ACTION_SPACE = 2
    BATCH = 1000   # not a multiple of 128: exercises pad-up path; grid = 2 steps x 512 rows

    key = jax.random.PRNGKey(0)
    key, kx = jax.random.split(key)
    x = jax.random.normal(kx, (BATCH, 3), dtype=jnp.float32)
    params = init_params(key, ACTION_SPACE)
    prepared = prepare_params(params)   # one-time prep, outside the per-call path

    out = jax.block_until_ready(mlp_forward(x, prepared))

    ref = reference_forward(x, params, emulate_bf16=True)
    assert out.shape == (BATCH, ACTION_SPACE), out.shape
    max_err = float(jnp.max(jnp.abs(out - ref)))
    assert jnp.allclose(out, ref, atol=1e-3, rtol=1e-3), f"max abs err = {max_err}"
    print("KERNEL_OK")
</pallas_src>

<mosaic_0001>
module attributes {stable_mosaic.version = 11 : i64} {
  func.func @_mlp_kernel(%arg0: i32, %arg1: memref<512x3xf32, #tpu.memory_space<vmem>>, %arg2: memref<3x6xbf16, #tpu.memory_space<vmem>>, %arg3: memref<1x6xf32, #tpu.memory_space<vmem>>, %arg4: memref<6x12xbf16, #tpu.memory_space<vmem>>, %arg5: memref<1x12xf32, #tpu.memory_space<vmem>>, %arg6: memref<12x24xbf16, #tpu.memory_space<vmem>>, %arg7: memref<1x24xf32, #tpu.memory_space<vmem>>, %arg8: memref<24x8xbf16, #tpu.memory_space<vmem>>, %arg9: memref<1x8xf32, #tpu.memory_space<vmem>>, %arg10: memref<8x4xbf16, #tpu.memory_space<vmem>>, %arg11: memref<1x4xf32, #tpu.memory_space<vmem>>, %arg12: memref<4x2xbf16, #tpu.memory_space<vmem>>, %arg13: memref<1x2xf32, #tpu.memory_space<vmem>>, %arg14: memref<512x2xf32, #tpu.memory_space<vmem>>) attributes {dimension_semantics = [#tpu.dimension_semantics<parallel>], iteration_bounds = array<i64: 2>, scalar_prefetch = 0 : i64, scratch_operands = 0 : i64, tpu.core_type = #tpu.core_type<tc>, window_params = [{transform_indices = @transform_0, window_bounds = array<i64: 512, 3>}, {pipeline_mode = #tpu.pipeline_mode<synchronous>, transform_indices = @transform_1, window_bounds = array<i64: 3, 6>}, {pipeline_mode = #tpu.pipeline_mode<synchronous>, transform_indices = @transform_2, window_bounds = array<i64: 1, 6>}, {pipeline_mode = #tpu.pipeline_mode<synchronous>, transform_indices = @transform_3, window_bounds = array<i64: 6, 12>}, {pipeline_mode = #tpu.pipeline_mode<synchronous>, transform_indices = @transform_4, window_bounds = array<i64: 1, 12>}, {pipeline_mode = #tpu.pipeline_mode<synchronous>, transform_indices = @transform_5, window_bounds = array<i64: 12, 24>}, {pipeline_mode = #tpu.pipeline_mode<synchronous>, transform_indices = @transform_6, window_bounds = array<i64: 1, 24>}, {pipeline_mode = #tpu.pipeline_mode<synchronous>, transform_indices = @transform_7, window_bounds = array<i64: 24, 8>}, {pipeline_mode = #tpu.pipeline_mode<synchronous>, transform_indices = @transform_8, window_bounds = array<i64: 1, 8>}, {pipeline_mode = #tpu.pipeline_mode<synchronous>, transform_indices = @transform_9, window_bounds = array<i64: 8, 4>}, {pipeline_mode = #tpu.pipeline_mode<synchronous>, transform_indices = @transform_10, window_bounds = array<i64: 1, 4>}, {pipeline_mode = #tpu.pipeline_mode<synchronous>, transform_indices = @transform_11, window_bounds = array<i64: 4, 2>}, {pipeline_mode = #tpu.pipeline_mode<synchronous>, transform_indices = @transform_12, window_bounds = array<i64: 1, 2>}, {transform_indices = @transform_13, window_bounds = array<i64: 512, 2>}]} {
    %c0 = arith.constant 0 : index
    %c0_0 = arith.constant 0 : index
    %0 = vector.load %arg2[%c0, %c0_0] : memref<3x6xbf16, #tpu.memory_space<vmem>>, vector<3x6xbf16>
    %c0_1 = arith.constant 0 : index
    %c0_2 = arith.constant 0 : index
    %1 = vector.load %arg4[%c0_1, %c0_2] : memref<6x12xbf16, #tpu.memory_space<vmem>>, vector<6x12xbf16>
    %c0_3 = arith.constant 0 : index
    %c0_4 = arith.constant 0 : index
    %2 = vector.load %arg6[%c0_3, %c0_4] : memref<12x24xbf16, #tpu.memory_space<vmem>>, vector<12x24xbf16>
    %c0_5 = arith.constant 0 : index
    %c0_6 = arith.constant 0 : index
    %3 = vector.load %arg8[%c0_5, %c0_6] : memref<24x8xbf16, #tpu.memory_space<vmem>>, vector<24x8xbf16>
    %c0_7 = arith.constant 0 : index
    %c0_8 = arith.constant 0 : index
    %4 = vector.load %arg10[%c0_7, %c0_8] : memref<8x4xbf16, #tpu.memory_space<vmem>>, vector<8x4xbf16>
    %c0_9 = arith.constant 0 : index
    %c0_10 = arith.constant 0 : index
    %5 = vector.load %arg12[%c0_9, %c0_10] : memref<4x2xbf16, #tpu.memory_space<vmem>>, vector<4x2xbf16>
    %c0_11 = arith.constant 0 : index
    %c0_12 = arith.constant 0 : index
    %6 = vector.load %arg3[%c0_11, %c0_12] : memref<1x6xf32, #tpu.memory_space<vmem>>, vector<1x6xf32>
    %c0_13 = arith.constant 0 : index
    %c0_14 = arith.constant 0 : index
    %7 = vector.load %arg5[%c0_13, %c0_14] : memref<1x12xf32, #tpu.memory_space<vmem>>, vector<1x12xf32>
    %c0_15 = arith.constant 0 : index
    %c0_16 = arith.constant 0 : index
    %8 = vector.load %arg7[%c0_15, %c0_16] : memref<1x24xf32, #tpu.memory_space<vmem>>, vector<1x24xf32>
    %c0_17 = arith.constant 0 : index
    %c0_18 = arith.constant 0 : index
    %9 = vector.load %arg9[%c0_17, %c0_18] : memref<1x8xf32, #tpu.memory_space<vmem>>, vector<1x8xf32>
    %c0_19 = arith.constant 0 : index
    %c0_20 = arith.constant 0 : index
    %10 = vector.load %arg11[%c0_19, %c0_20] : memref<1x4xf32, #tpu.memory_space<vmem>>, vector<1x4xf32>
    %c0_21 = arith.constant 0 : index
    %c0_22 = arith.constant 0 : index
    %11 = vector.load %arg13[%c0_21, %c0_22] : memref<1x2xf32, #tpu.memory_space<vmem>>, vector<1x2xf32>
    %c0_i32 = arith.constant 0 : i32
    %c2_i32 = arith.constant 2 : i32
    %12 = arith.addi %c0_i32, %c2_i32 : i32
    %c1_i32 = arith.constant 1 : i32
    scf.for %arg15 = %c0_i32 to %12 step %c1_i32  : i32 {
      %c256_i32 = arith.constant 256 : i32
      %13 = arith.muli %arg15, %c256_i32 : i32
      %14 = tpu.assume_multiple %13, 256 : i32
      %15 = arith.index_cast %14 : i32 to index
      %c0_24 = arith.constant 0 : index
      %16 = vector.load %arg1[%15, %c0_24] : memref<512x3xf32, #tpu.memory_space<vmem>>, vector<256x3xf32>
      %17 = arith.truncf %16 : vector<256x3xf32> to vector<256x3xbf16>
      %cst = arith.constant dense<0.000000e+00> : vector<256x6xf32>
      %18 = tpu.matmul %17, %0, %cst {dimension_numbers = #tpu.dot_dimension_numbers<[1], [0], [0], [1], [0, 0, 1, 1], [], []>} : vector<256x3xbf16>, vector<3x6xbf16>, vector<256x6xf32> -> vector<256x6xf32>
      %19 = vector.broadcast %6 : vector<1x6xf32> to vector<256x6xf32>
      %20 = arith.addf %18, %19 : vector<256x6xf32>
      %cst_25 = arith.constant 0.000000e+00 : f32
      %21 = vector.broadcast %cst_25 : f32 to vector<256x6xf32>
      %22 = arith.maximumf %20, %21 : vector<256x6xf32>
      %23 = arith.truncf %22 : vector<256x6xf32> to vector<256x6xbf16>
      %cst_26 = arith.constant dense<0.000000e+00> : vector<256x12xf32>
      %24 = tpu.matmul %23, %1, %cst_26 {dimension_numbers = #tpu.dot_dimension_numbers<[1], [0], [0], [1], [0, 0, 1, 1], [], []>} : vector<256x6xbf16>, vector<6x12xbf16>, vector<256x12xf32> -> vector<256x12xf32>
      %25 = vector.broadcast %7 : vector<1x12xf32> to vector<256x12xf32>
      %26 = arith.addf %24, %25 : vector<256x12xf32>
      %cst_27 = arith.constant 0.000000e+00 : f32
      %27 = vector.broadcast %cst_27 : f32 to vector<256x12xf32>
      %28 = arith.maximumf %26, %27 : vector<256x12xf32>
      %29 = arith.truncf %28 : vector<256x12xf32> to vector<256x12xbf16>
      %cst_28 = arith.constant dense<0.000000e+00> : vector<256x24xf32>
      %30 = tpu.matmul %29, %2, %cst_28 {dimension_numbers = #tpu.dot_dimension_numbers<[1], [0], [0], [1], [0, 0, 1, 1], [], []>} : vector<256x12xbf16>, vector<12x24xbf16>, vector<256x24xf32> -> vector<256x24xf32>
      %31 = vector.broadcast %8 : vector<1x24xf32> to vector<256x24xf32>
      %32 = arith.addf %30, %31 : vector<256x24xf32>
      %cst_29 = arith.constant 0.000000e+00 : f32
      %33 = vector.broadcast %cst_29 : f32 to vector<256x24xf32>
      %34 = arith.maximumf %32, %33 : vector<256x24xf32>
      %35 = arith.truncf %34 : vector<256x24xf32> to vector<256x24xbf16>
      %cst_30 = arith.constant dense<0.000000e+00> : vector<256x8xf32>
      %36 = tpu.matmul %35, %3, %cst_30 {dimension_numbers = #tpu.dot_dimension_numbers<[1], [0], [0], [1], [0, 0, 1, 1], [], []>} : vector<256x24xbf16>, vector<24x8xbf16>, vector<256x8xf32> -> vector<256x8xf32>
      %37 = vector.broadcast %9 : vector<1x8xf32> to vector<256x8xf32>
      %38 = arith.addf %36, %37 : vector<256x8xf32>
      %cst_31 = arith.constant 0.000000e+00 : f32
      %39 = vector.broadcast %cst_31 : f32 to vector<256x8xf32>
      %40 = arith.maximumf %38, %39 : vector<256x8xf32>
      %41 = arith.truncf %40 : vector<256x8xf32> to vector<256x8xbf16>
      %cst_32 = arith.constant dense<0.000000e+00> : vector<256x4xf32>
      %42 = tpu.matmul %41, %4, %cst_32 {dimension_numbers = #tpu.dot_dimension_numbers<[1], [0], [0], [1], [0, 0, 1, 1], [], []>} : vector<256x8xbf16>, vector<8x4xbf16>, vector<256x4xf32> -> vector<256x4xf32>
      %43 = vector.broadcast %10 : vector<1x4xf32> to vector<256x4xf32>
      %44 = arith.addf %42, %43 : vector<256x4xf32>
      %cst_33 = arith.constant 0.000000e+00 : f32
      %45 = vector.broadcast %cst_33 : f32 to vector<256x4xf32>
      %46 = arith.maximumf %44, %45 : vector<256x4xf32>
      %47 = arith.truncf %46 : vector<256x4xf32> to vector<256x4xbf16>
      %cst_34 = arith.constant dense<0.000000e+00> : vector<256x2xf32>
      %48 = tpu.matmul %47, %5, %cst_34 {dimension_numbers = #tpu.dot_dimension_numbers<[1], [0], [0], [1], [0, 0, 1, 1], [], []>} : vector<256x4xbf16>, vector<4x2xbf16>, vector<256x2xf32> -> vector<256x2xf32>
      %49 = vector.broadcast %11 : vector<1x2xf32> to vector<256x2xf32>
      %50 = arith.addf %48, %49 : vector<256x2xf32>
      %51 = arith.index_cast %14 : i32 to index
      %c0_35 = arith.constant 0 : index
      %52 = vector.load %arg14[%51, %c0_35] : memref<512x2xf32, #tpu.memory_space<vmem>>, vector<256x2xf32>
      tpu.vector_store %arg14[%51, %c0_35], %50 {strides = array<i32>} : memref<512x2xf32, #tpu.memory_space<vmem>>, vector<256x2xf32>,
    }
    %c2_i32_23 = arith.constant 2 : i32
    return
  }
  func.func @transform_0(%arg0: i32) -> (i32, i32) {
    %c0_i32 = arith.constant 0 : i32
    %c0_i32_0 = arith.constant 0 : i32
    return %arg0, %c0_i32 : i32, i32
  }
  func.func @transform_1(%arg0: i32) -> (i32, i32) {
    %c0_i32 = arith.constant 0 : i32
    %c0_i32_0 = arith.constant 0 : i32
    %c0_i32_1 = arith.constant 0 : i32
    return %c0_i32, %c0_i32_0 : i32, i32
  }
  func.func @transform_2(%arg0: i32) -> (i32, i32) {
    %c0_i32 = arith.constant 0 : i32
    %c0_i32_0 = arith.constant 0 : i32
    %c0_i32_1 = arith.constant 0 : i32
    return %c0_i32, %c0_i32_0 : i32, i32
  }
  func.func @transform_3(%arg0: i32) -> (i32, i32) {
    %c0_i32 = arith.constant 0 : i32
    %c0_i32_0 = arith.constant 0 : i32
    %c0_i32_1 = arith.constant 0 : i32
    return %c0_i32, %c0_i32_0 : i32, i32
  }
  func.func @transform_4(%arg0: i32) -> (i32, i32) {
    %c0_i32 = arith.constant 0 : i32
    %c0_i32_0 = arith.constant 0 : i32
    %c0_i32_1 = arith.constant 0 : i32
    return %c0_i32, %c0_i32_0 : i32, i32
  }
  func.func @transform_5(%arg0: i32) -> (i32, i32) {
    %c0_i32 = arith.constant 0 : i32
    %c0_i32_0 = arith.constant 0 : i32
    %c0_i32_1 = arith.constant 0 : i32
    return %c0_i32, %c0_i32_0 : i32, i32
  }
  func.func @transform_6(%arg0: i32) -> (i32, i32) {
    %c0_i32 = arith.constant 0 : i32
    %c0_i32_0 = arith.constant 0 : i32
    %c0_i32_1 = arith.constant 0 : i32
    return %c0_i32, %c0_i32_0 : i32, i32
  }
  func.func @transform_7(%arg0: i32) -> (i32, i32) {
    %c0_i32 = arith.constant 0 : i32
    %c0_i32_0 = arith.constant 0 : i32
    %c0_i32_1 = arith.constant 0 : i32
    return %c0_i32, %c0_i32_0 : i32, i32
  }
  func.func @transform_8(%arg0: i32) -> (i32, i32) {
    %c0_i32 = arith.constant 0 : i32
    %c0_i32_0 = arith.constant 0 : i32
    %c0_i32_1 = arith.constant 0 : i32
    return %c0_i32, %c0_i32_0 : i32, i32
  }
  func.func @transform_9(%arg0: i32) -> (i32, i32) {
    %c0_i32 = arith.constant 0 : i32
    %c0_i32_0 = arith.constant 0 : i32
    %c0_i32_1 = arith.constant 0 : i32
    return %c0_i32, %c0_i32_0 : i32, i32
  }
  func.func @transform_10(%arg0: i32) -> (i32, i32) {
    %c0_i32 = arith.constant 0 : i32
    %c0_i32_0 = arith.constant 0 : i32
    %c0_i32_1 = arith.constant 0 : i32
    return %c0_i32, %c0_i32_0 : i32, i32
  }
  func.func @transform_11(%arg0: i32) -> (i32, i32) {
    %c0_i32 = arith.constant 0 : i32
    %c0_i32_0 = arith.constant 0 : i32
    %c0_i32_1 = arith.constant 0 : i32
    return %c0_i32, %c0_i32_0 : i32, i32
  }
  func.func @transform_12(%arg0: i32) -> (i32, i32) {
    %c0_i32 = arith.constant 0 : i32
    %c0_i32_0 = arith.constant 0 : i32
    %c0_i32_1 = arith.constant 0 : i32
    return %c0_i32, %c0_i32_0 : i32, i32
  }
  func.func @transform_13(%arg0: i32) -> (i32, i32) {
    %c0_i32 = arith.constant 0 : i32
    %c0_i32_0 = arith.constant 0 : i32
    return %arg0, %c0_i32 : i32, i32
  }
}

</mosaic_0001>

<llo_original>
// kernel: tpu_custom_call.1
$region0: #{tpu_custom_call.1}
  #allocation0 [shape = 'u32[]', space=smem, size = 0x4, offset = 0x4, fixed_abs, tag = 'smem constant byte address 0x4 - core index']
  #allocation1 [shape = 'u32[144,128]{1,0:T(1,128)}', space=vmem, size = 0x12000, scoped, tag = 'internal scratch']
  %s0 = inlined_call_operand.vmem [shape: f32[1024,3], index: 0, kind: input, shape index: {}]
  %s1 = inlined_call_operand.vmem [shape: bf16[3,6], index: 1, kind: input, shape index: {}]
  %s2 = inlined_call_operand.vmem [shape: f32[1,6], index: 2, kind: input, shape index: {}]
  %s3 = inlined_call_operand.vmem [shape: bf16[6,12], index: 3, kind: input, shape index: {}]
  %s4 = inlined_call_operand.vmem [shape: f32[1,12], index: 4, kind: input, shape index: {}]
  %s5 = inlined_call_operand.vmem [shape: bf16[12,24], index: 5, kind: input, shape index: {}]
  %s6 = inlined_call_operand.vmem [shape: f32[1,24], index: 6, kind: input, shape index: {}]
  %s7 = inlined_call_operand.vmem [shape: bf16[24,8], index: 7, kind: input, shape index: {}]
  %s8 = inlined_call_operand.vmem [shape: f32[1,8], index: 8, kind: input, shape index: {}]
  %s9 = inlined_call_operand.vmem [shape: bf16[8,4], index: 9, kind: input, shape index: {}]
  %s10 = inlined_call_operand.vmem [shape: f32[1,4], index: 10, kind: input, shape index: {}]
  %s11 = inlined_call_operand.vmem [shape: bf16[4,2], index: 11, kind: input, shape index: {}]
  %s12 = inlined_call_operand.vmem [shape: f32[1,2], index: 12, kind: input, shape index: {}]
  %s13 = inlined_call_operand.vmem [shape: f32[1024,2], index: 13, kind: output, shape index: {}]
  %s14 = sld [smem:[#allocation0]]
  $region92: #{tpu_custom_call.1} parent=0
    _
  %s16 = ssub.s32 1, %s14
  %s17 = scalar_select 0, %s16, %s14
  loop: start=0, step=1, limit=4
  $region2: #{tpu_custom_call.1} parent=0 // loop_pre_header
    _
  $region3: #{tpu_custom_call.1} parent=0 // loop_header
    %s19 = sphi 0, %s23
    %p20 = scmp.ge.s32.totalorder %s19, 4
    %s29 = sphi 0, %s31
    %s32 = sphi 0, %s29
    %s33 = sphi 0, %s32
    %s49 = sphi 0, %s33
    %s53 = sphi 0, %s53
    %s55 = sphi 0, %s53
    %s56 = sphi 0, %s55
    %s70 = sphi 0, %s56
    %s74 = sphi 0, %s74
    %s76 = sphi 0, %s74
    %s77 = sphi 0, %s76
    %s91 = sphi 0, %s77
    %s95 = sphi 0, %s95
    %s97 = sphi 0, %s95
    %s98 = sphi 0, %s97
    %s112 = sphi 0, %s98
    %s116 = sphi 0, %s116
    %s118 = sphi 0, %s116
    %s119 = sphi 0, %s118
    %s133 = sphi 0, %s119
    %s137 = sphi 0, %s137
    %s139 = sphi 0, %s137
    %s140 = sphi 0, %s139
    %s154 = sphi 0, %s140
    %s158 = sphi 0, %s158
    %s160 = sphi 0, %s158
    %s161 = sphi 0, %s160
    %s175 = sphi 0, %s161
    %s179 = sphi 0, %s179
    %s181 = sphi 0, %s179
    %s182 = sphi 0, %s181
    %s196 = sphi 0, %s182
    %s200 = sphi 0, %s200
    %s202 = sphi 0, %s200
    %s203 = sphi 0, %s202
    %s217 = sphi 0, %s203
    %s221 = sphi 0, %s221
    %s223 = sphi 0, %s221
    %s224 = sphi 0, %s223
    %s238 = sphi 0, %s224
    %s242 = sphi 0, %s242
    %s244 = sphi 0, %s242
    %s245 = sphi 0, %s244
    %s259 = sphi 0, %s245
    %s263 = sphi 0, %s263
    %s265 = sphi 0, %s263
    %s266 = sphi 0, %s265
    %s280 = sphi 0, %s266
    %s284 = sphi 0, %s284
    %s286 = sphi 0, %s284
    %s287 = sphi 0, %s286
    %s301 = sphi 0, %s287
    %s307 = sphi 0, %s309
    %s310 = sphi 0, %s307
    %s311 = sphi 0, %s310
    %s327 = sphi 0, %s311
  $region4: #{tpu_custom_call.1} parent=0 // loop_header_branch
    %22 = sbr.rel (%p20) target = $region8
  $region5: #{tpu_custom_call.1} parent=0 // loop_body
    %s24 = ssub.s32 %s19, 1
    %s25 = ssub.s32 %s19, 2
    %s26 = sadd.s32 %s19, 1
    %s27 = ssub.s32 %s19, %s26
    %p28 = scmp.eq.s32.totalorder %s27, 0
    %s30 = sadd.s32 %s29, 1
    %s31 = scalar_select %p28, %s29, %s30
    %p34 = pneg %p28
    %p35 = scmp.eq.s32.totalorder %s19, 1
    %p36 = por %p34, %p35
    %p37 = scmp.ne.s32.totalorder %s29, %s32
    %p38 = scmp.eq.s32.totalorder %s19, 0
    %p39 = por %p37, %p38
    %p40 = scmp.ne.s32.totalorder %s29, %s32
    %p41 = scmp.eq.s32.totalorder %s24, 1
    %p42 = por %p40, %p41
    %p43 = scmp.ne.s32.totalorder %s32, %s33
    %p44 = scmp.eq.s32.totalorder %s24, 0
    %p45 = por %p43, %p44
    %p46 = scmp.ne.s32.totalorder %s32, %s33
    %p47 = scmp.eq.s32.totalorder %s25, 1
    %p48 = por %p46, %p47
    %p50 = scmp.ne.s32.totalorder %s33, %s49
    %p51 = scmp.eq.s32.totalorder %s25, 0
    %p52 = por %p50, %p51
    %s54 = sadd.s32 %s53, 1
    %p57 = scmp.eq.s32.totalorder %s19, 1
    %p58 = scmp.ne.s32.totalorder %s53, %s55
    %p59 = scmp.eq.s32.totalorder %s19, 0
    %p60 = por %p58, %p59
    %p61 = scmp.ne.s32.totalorder %s53, %s55
    %p62 = scmp.eq.s32.totalorder %s24, 1
    %p63 = por %p61, %p62
    %p64 = scmp.ne.s32.totalorder %s55, %s56
    %p65 = scmp.eq.s32.totalorder %s24, 0
    %p66 = por %p64, %p65
    %p67 = scmp.ne.s32.totalorder %s55, %s56
    %p68 = scmp.eq.s32.totalorder %s25, 1
    %p69 = por %p67, %p68
    %p71 = scmp.ne.s32.totalorder %s56, %s70
    %p72 = scmp.eq.s32.totalorder %s25, 0
    %p73 = por %p71, %p72
    %s75 = sadd.s32 %s74, 1
    %p78 = scmp.eq.s32.totalorder %s19, 1
    %p79 = scmp.ne.s32.totalorder %s74, %s76
    %p80 = scmp.eq.s32.totalorder %s19, 0
    %p81 = por %p79, %p80
    %p82 = scmp.ne.s32.totalorder %s74, %s76
    %p83 = scmp.eq.s32.totalorder %s24, 1
    %p84 = por %p82, %p83
    %p85 = scmp.ne.s32.totalorder %s76, %s77
    %p86 = scmp.eq.s32.totalorder %s24, 0
    %p87 = por %p85, %p86
    %p88 = scmp.ne.s32.totalorder %s76, %s77
    %p89 = scmp.eq.s32.totalorder %s25, 1
    %p90 = por %p88, %p89
    %p92 = scmp.ne.s32.totalorder %s77, %s91
    %p93 = scmp.eq.s32.totalorder %s25, 0
    %p94 = por %p92, %p93
    %s96 = sadd.s32 %s95, 1
    %p99 = scmp.eq.s32.totalorder %s19, 1
    %p100 = scmp.ne.s32.totalorder %s95, %s97
    %p101 = scmp.eq.s32.totalorder %s19, 0
    %p102 = por %p100, %p101
    %p103 = scmp.ne.s32.totalorder %s95, %s97
    %p104 = scmp.eq.s32.totalorder %s24, 1
    %p105 = por %p103, %p104
    %p106 = scmp.ne.s32.totalorder %s97, %s98
    %p107 = scmp.eq.s32.totalorder %s24, 0
    %p108 = por %p106, %p107
    %p109 = scmp.ne.s32.totalorder %s97, %s98
    %p110 = scmp.eq.s32.totalorder %s25, 1
    %p111 = por %p109, %p110
    %p113 = scmp.ne.s32.totalorder %s98, %s112
    %p114 = scmp.eq.s32.totalorder %s25, 0
    %p115 = por %p113, %p114
    %s117 = sadd.s32 %s116, 1
    %p120 = scmp.eq.s32.totalorder %s19, 1
    %p121 = scmp.ne.s32.totalorder %s116, %s118
    %p122 = scmp.eq.s32.totalorder %s19, 0
    %p123 = por %p121, %p122
    %p124 = scmp.ne.s32.totalorder %s116, %s118
    %p125 = scmp.eq.s32.totalorder %s24, 1
    %p126 = por %p124, %p125
    %p127 = scmp.ne.s32.totalorder %s118, %s119
    %p128 = scmp.eq.s32.totalorder %s24, 0
    %p129 = por %p127, %p128
    %p130 = scmp.ne.s32.totalorder %s118, %s119
    %p131 = scmp.eq.s32.totalorder %s25, 1
    %p132 = por %p130, %p131
    %p134 = scmp.ne.s32.totalorder %s119, %s133
    %p135 = scmp.eq.s32.totalorder %s25, 0
    %p136 = por %p134, %p135
    %s138 = sadd.s32 %s137, 1
    %p141 = scmp.eq.s32.totalorder %s19, 1
    %p142 = scmp.ne.s32.totalorder %s137, %s139
    %p143 = scmp.eq.s32.totalorder %s19, 0
    %p144 = por %p142, %p143
    %p145 = scmp.ne.s32.totalorder %s137, %s139
    %p146 = scmp.eq.s32.totalorder %s24, 1
    %p147 = por %p145, %p146
    %p148 = scmp.ne.s32.totalorder %s139, %s140
    %p149 = scmp.eq.s32.totalorder %s24, 0
    %p150 = por %p148, %p149
    %p151 = scmp.ne.s32.totalorder %s139, %s140
    %p152 = scmp.eq.s32.totalorder %s25, 1
    %p153 = por %p151, %p152
    %p155 = scmp.ne.s32.totalorder %s140, %s154
    %p156 = scmp.eq.s32.totalorder %s25, 0
    %p157 = por %p155, %p156
    %s159 = sadd.s32 %s158, 1
    %p162 = scmp.eq.s32.totalorder %s19, 1
    %p163 = scmp.ne.s32.totalorder %s158, %s160
    %p164 = scmp.eq.s32.totalorder %s19, 0
    %p165 = por %p163, %p164
    %p166 = scmp.ne.s32.totalorder %s158, %s160
    %p167 = scmp.eq.s32.totalorder %s24, 1
    %p168 = por %p166, %p167
    %p169 = scmp.ne.s32.totalorder %s160, %s161
    %p170 = scmp.eq.s32.totalorder %s24, 0
    %p171 = por %p169, %p170
    %p172 = scmp.ne.s32.totalorder %s160, %s161
    %p173 = scmp.eq.s32.totalorder %s25, 1
    %p174 = por %p172, %p173
    %p176 = scmp.ne.s32.totalorder %s161, %s175
    %p177 = scmp.eq.s32.totalorder %s25, 0
    %p178 = por %p176, %p177
    %s180 = sadd.s32 %s179, 1
    %p183 = scmp.eq.s32.totalorder %s19, 1
    %p184 = scmp.ne.s32.totalorder %s179, %s181
    %p185 = scmp.eq.s32.totalorder %s19, 0
    %p186 = por %p184, %p185
    %p187 = scmp.ne.s32.totalorder %s179, %s181
    %p188 = scmp.eq.s32.totalorder %s24, 1
    %p189 = por %p187, %p188
    %p190 = scmp.ne.s32.totalorder %s181, %s182
    %p191 = scmp.eq.s32.totalorder %s24, 0
    %p192 = por %p190, %p191
    %p193 = scmp.ne.s32.totalorder %s181, %s182
    %p194 = scmp.eq.s32.totalorder %s25, 1
    %p195 = por %p193, %p194
    %p197 = scmp.ne.s32.totalorder %s182, %s196
    %p198 = scmp.eq.s32.totalorder %s25, 0
    %p199 = por %p197, %p198
    %s201 = sadd.s32 %s200, 1
    %p204 = scmp.eq.s32.totalorder %s19, 1
    %p205 = scmp.ne.s32.totalorder %s200, %s202
    %p206 = scmp.eq.s32.totalorder %s19, 0
    %p207 = por %p205, %p206
    %p208 = scmp.ne.s32.totalorder %s200, %s202
    %p209 = scmp.eq.s32.totalorder %s24, 1
    %p210 = por %p208, %p209
    %p211 = scmp.ne.s32.totalorder %s202, %s203
    %p212 = scmp.eq.s32.totalorder %s24, 0
    %p213 = por %p211, %p212
    %p214 = scmp.ne.s32.totalorder %s202, %s203
    %p215 = scmp.eq.s32.totalorder %s25, 1
    %p216 = por %p214, %p215
    %p218 = scmp.ne.s32.totalorder %s203, %s217
    %p219 = scmp.eq.s32.totalorder %s25, 0
    %p220 = por %p218, %p219
    %s222 = sadd.s32 %s221, 1
    %p225 = scmp.eq.s32.totalorder %s19, 1
    %p226 = scmp.ne.s32.totalorder %s221, %s223
    %p227 = scmp.eq.s32.totalorder %s19, 0
    %p228 = por %p226, %p227
    %p229 = scmp.ne.s32.totalorder %s221, %s223
    %p230 = scmp.eq.s32.totalorder %s24, 1
    %p231 = por %p229, %p230
    %p232 = scmp.ne.s32.totalorder %s223, %s224
    %p233 = scmp.eq.s32.totalorder %s24, 0
    %p234 = por %p232, %p233
    %p235 = scmp.ne.s32.totalorder %s223, %s224
    %p236 = scmp.eq.s32.totalorder %s25, 1
    %p237 = por %p235, %p236
    %p239 = scmp.ne.s32.totalorder %s224, %s238
    %p240 = scmp.eq.s32.totalorder %s25, 0
    %p241 = por %p239, %p240
    %s243 = sadd.s32 %s242, 1
    %p246 = scmp.eq.s32.totalorder %s19, 1
    %p247 = scmp.ne.s32.totalorder %s242, %s244
    %p248 = scmp.eq.s32.totalorder %s19, 0
    %p249 = por %p247, %p248
    %p250 = scmp.ne.s32.totalorder %s242, %s244
    %p251 = scmp.eq.s32.totalorder %s24, 1
    %p252 = por %p250, %p251
    %p253 = scmp.ne.s32.totalorder %s244, %s245
    %p254 = scmp.eq.s32.totalorder %s24, 0
    %p255 = por %p253, %p254
    %p256 = scmp.ne.s32.totalorder %s244, %s245
    %p257 = scmp.eq.s32.totalorder %s25, 1
    %p258 = por %p256, %p257
    %p260 = scmp.ne.s32.totalorder %s245, %s259
    %p261 = scmp.eq.s32.totalorder %s25, 0
    %p262 = por %p260, %p261
    %s264 = sadd.s32 %s263, 1
    %p267 = scmp.eq.s32.totalorder %s19, 1
    %p268 = scmp.ne.s32.totalorder %s263, %s265
    %p269 = scmp.eq.s32.totalorder %s19, 0
    %p270 = por %p268, %p269
    %p271 = scmp.ne.s32.totalorder %s263, %s265
    %p272 = scmp.eq.s32.totalorder %s24, 1
    %p273 = por %p271, %p272
    %p274 = scmp.ne.s32.totalorder %s265, %s266
    %p275 = scmp.eq.s32.totalorder %s24, 0
    %p276 = por %p274, %p275
    %p277 = scmp.ne.s32.totalorder %s265, %s266
    %p278 = scmp.eq.s32.totalorder %s25, 1
    %p279 = por %p277, %p278
    %p281 = scmp.ne.s32.totalorder %s266, %s280
    %p282 = scmp.eq.s32.totalorder %s25, 0
    %p283 = por %p281, %p282
    %s285 = sadd.s32 %s284, 1
    %p288 = scmp.eq.s32.totalorder %s19, 1
    %p289 = scmp.ne.s32.totalorder %s284, %s286
    %p290 = scmp.eq.s32.totalorder %s19, 0
    %p291 = por %p289, %p290
    %p292 = scmp.ne.s32.totalorder %s284, %s286
    %p293 = scmp.eq.s32.totalorder %s24, 1
    %p294 = por %p292, %p293
    %p295 = scmp.ne.s32.totalorder %s286, %s287
    %p296 = scmp.eq.s32.totalorder %s24, 0
    %p297 = por %p295, %p296
    %p298 = scmp.ne.s32.totalorder %s286, %s287
    %p299 = scmp.eq.s32.totalorder %s25, 1
    %p300 = por %p298, %p299
    %p302 = scmp.ne.s32.totalorder %s287, %s301
    %p303 = scmp.eq.s32.totalorder %s25, 0
    %p304 = por %p302, %p303
    %s305 = ssub.s32 %s19, %s26
    %p306 = scmp.eq.s32.totalorder %s305, 0
    %s308 = sadd.s32 %s307, 1
    %s309 = scalar_select %p306, %s307, %s308
    %p312 = pneg %p306
    %p313 = scmp.eq.s32.totalorder %s19, 1
    %p314 = por %p312, %p313
    %p315 = scmp.ne.s32.totalorder %s307, %s310
    %p316 = scmp.eq.s32.totalorder %s19, 0
    %p317 = por %p315, %p316
    %p318 = scmp.ne.s32.totalorder %s307, %s310
    %p319 = scmp.eq.s32.totalorder %s24, 1
    %p320 = por %p318, %p319
    %p321 = scmp.ne.s32.totalorder %s310, %s311
    %p322 = scmp.eq.s32.totalorder %s24, 0
    %p323 = por %p321, %p322
    %p324 = scmp.ne.s32.totalorder %s310, %s311
    %p325 = scmp.eq.s32.totalorder %s25, 1
    %p326 = por %p324, %p325
    %p328 = scmp.ne.s32.totalorder %s311, %s327
    %p329 = scmp.eq.s32.totalorder %s25, 0
    %p330 = por %p328, %p329
    %p331 = scmp.le.s32.totalorder 1, %s19
    %p332 = scmp.lt.s32.totalorder %s19, 3
    %p333 = pnand %p331, %p332
    %p334 = pneg %p333
    // Predicated region
    $region9: #{tpu_custom_call.1} parent=5 // pred_check
      _
    $region10: #{tpu_custom_call.1} parent=5 // pred_check_branch
      %336 = sbr.rel (%p333) target = $region12
    $region11: #{tpu_custom_call.1} parent=5 // pred_region
      %s337 = ssub.s32 %s19, 1
      // Predicated region
      $region13: #{tpu_custom_call.1} parent=11 // pred_check
        %p338 = pneg %p66
      $region14: #{tpu_custom_call.1} parent=11 // pred_check_branch
        %340 = sbr.rel (%p338) target = $region16
      $region15: #{tpu_custom_call.1} parent=11 // pred_region
        _
      $region16: #{tpu_custom_call.1} parent=11 // pred_fallthru
        _
      // Predicated region
      $region17: #{tpu_custom_call.1} parent=11 // pred_check
        %p341 = pneg %p87
      $region18: #{tpu_custom_call.1} parent=11 // pred_check_branch
        %343 = sbr.rel (%p341) target = $region20
      $region19: #{tpu_custom_call.1} parent=11 // pred_region
        _
      $region20: #{tpu_custom_call.1} parent=11 // pred_fallthru
        _
      // Predicated region
      $region21: #{tpu_custom_call.1} parent=11 // pred_check
        %p344 = pneg %p108
      $region22: #{tpu_custom_call.1} parent=11 // pred_check_branch
        %346 = sbr.rel (%p344) target = $region24
      $region23: #{tpu_custom_call.1} parent=11 // pred_region
        _
      $region24: #{tpu_custom_call.1} parent=11 // pred_fallthru
        _
      // Predicated region
      $region25: #{tpu_custom_call.1} parent=11 // pred_check
        %p347 = pneg %p129
      $region26: #{tpu_custom_call.1} parent=11 // pred_check_branch
        %349 = sbr.rel (%p347) target = $region28
      $region27: #{tpu_custom_call.1} parent=11 // pred_region
        _
      $region28: #{tpu_custom_call.1} parent=11 // pred_fallthru
        _
      // Predicated region
      $region29: #{tpu_custom_call.1} parent=11 // pred_check
        %p350 = pneg %p150
      $region30: #{tpu_custom_call.1} parent=11 // pred_check_branch
        %352 = sbr.rel (%p350) target = $region32
      $region31: #{tpu_custom_call.1} parent=11 // pred_region
        _
      $region32: #{tpu_custom_call.1} parent=11 // pred_fallthru
        _
      // Predicated region
      $region33: #{tpu_custom_call.1} parent=11 // pred_check
        %p353 = pneg %p171
      $region34: #{tpu_custom_call.1} parent=11 // pred_check_branch
        %355 = sbr.rel (%p353) target = $region36
      $region35: #{tpu_custom_call.1} parent=11 // pred_region
        _
      $region36: #{tpu_custom_call.1} parent=11 // pred_fallthru
        _
      // Predicated region
      $region37: #{tpu_custom_call.1} parent=11 // pred_check
        %p356 = pneg %p192
      $region38: #{tpu_custom_call.1} parent=11 // pred_check_branch
        %358 = sbr.rel (%p356) target = $region40
      $region39: #{tpu_custom_call.1} parent=11 // pred_region
        _
      $region40: #{tpu_custom_call.1} parent=11 // pred_fallthru
        _
      // Predicated region
      $region41: #{tpu_custom_call.1} parent=11 // pred_check
        %p359 = pneg %p213
      $region42: #{tpu_custom_call.1} parent=11 // pred_check_branch
        %361 = sbr.rel (%p359) target = $region44
      $region43: #{tpu_custom_call.1} parent=11 // pred_region
        _
      $region44: #{tpu_custom_call.1} parent=11 // pred_fallthru
        _
      // Predicated region
      $region45: #{tpu_custom_call.1} parent=11 // pred_check
        %p362 = pneg %p234
      $region46: #{tpu_custom_call.1} parent=11 // pred_check_branch
        %364 = sbr.rel (%p362) target = $region48
      $region47: #{tpu_custom_call.1} parent=11 // pred_region
        _
      $region48: #{tpu_custom_call.1} parent=11 // pred_fallthru
        _
      // Predicated region
      $region49: #{tpu_custom_call.1} parent=11 // pred_check
        %p365 = pneg %p255
      $region50: #{tpu_custom_call.1} parent=11 // pred_check_branch
        %367 = sbr.rel (%p365) target = $region52
      $region51: #{tpu_custom_call.1} parent=11 // pred_region
        _
      $region52: #{tpu_custom_call.1} parent=11 // pred_fallthru
        _
      // Predicated region
      $region53: #{tpu_custom_call.1} parent=11 // pred_check
        %p368 = pneg %p276
      $region54: #{tpu_custom_call.1} parent=11 // pred_check_branch
        %370 = sbr.rel (%p368) target = $region56
      $region55: #{tpu_custom_call.1} parent=11 // pred_region
        _
      $region56: #{tpu_custom_call.1} parent=11 // pred_fallthru
        _
      // Predicated region
      $region57: #{tpu_custom_call.1} parent=11 // pred_check
        %p371 = pneg %p297
      $region58: #{tpu_custom_call.1} parent=11 // pred_check_branch
        %373 = sbr.rel (%p371) target = $region60
      $region59: #{tpu_custom_call.1} parent=11 // pred_region
        _
      $region60: #{tpu_custom_call.1} parent=11 // pred_fallthru
        _
    $region12: #{tpu_custom_call.1} parent=5 // pred_fallthru
      _
    %p374 = scmp.lt.s32.totalorder %s19, 2
    // Predicated region
    $region61: #{tpu_custom_call.1} parent=5 // pred_check
      %p375 = pneg %p374
    $region62: #{tpu_custom_call.1} parent=5 // pred_check_branch
      %377 = sbr.rel (%p375) target = $region64
    $region63: #{tpu_custom_call.1} parent=5 // pred_region
      // Predicated region
      $region65: #{tpu_custom_call.1} parent=63 // pred_check
        %p378 = pneg %p39
      $region66: #{tpu_custom_call.1} parent=63 // pred_check_branch
        %380 = sbr.rel (%p378) target = $region68
      $region67: #{tpu_custom_call.1} parent=63 // pred_region
        %s381 = smul.u32 64, %s19
        %p382 = scmp.lt.s32.totalorder %s381, 127
        %s383 = scalar_select %p382, %s381, 127
        %s384 = smul.addr %s383, 8
        %s385 = scalar_lea.vmem %s0, %s384
        %s386 = smul.u32 64, %s19
      $region68: #{tpu_custom_call.1} parent=63 // pred_fallthru
        _
    $region64: #{tpu_custom_call.1} parent=5 // pred_fallthru
      _
    %p387 = scmp.le.s32.totalorder 1, %s19
    %p388 = scmp.lt.s32.totalorder %s19, 3
    %p389 = pnand %p387, %p388
    %p390 = pneg %p389
    // Predicated region
    $region69: #{tpu_custom_call.1} parent=5 // pred_check
      _
    $region70: #{tpu_custom_call.1} parent=5 // pred_check_branch
      %392 = sbr.rel (%p389) target = $region72
    $region71: #{tpu_custom_call.1} parent=5 // pred_region
      %s393 = ssub.s32 %s19, 1
      %s394 = smul.u32 64, %s24
      %p395 = scmp.lt.s32.totalorder %s394, 127
      %s396 = scalar_select %p395, %s394, 127
      %s397 = smul.addr %s396, 8
      %s398 = scalar_lea.vmem %s0, %s397
      %p399 = pneg %p45
      %p400 = pneg %p42
      %p401 = pneg %p66
      %p402 = pneg %p63
      %p403 = pneg %p87
      %p404 = pneg %p84
      %p405 = pneg %p108
      %p406 = pneg %p105
      %p407 = pneg %p129
      %p408 = pneg %p126
      %p409 = pneg %p150
      %p410 = pneg %p147
      %p411 = pneg %p171
      %p412 = pneg %p168
      %p413 = pneg %p192
      %p414 = pneg %p189
      %p415 = pneg %p213
      %p416 = pneg %p210
      %p417 = pneg %p234
      %p418 = pneg %p231
      %p419 = pneg %p255
      %p420 = pneg %p252
      %p421 = pneg %p276
      %p422 = pneg %p273
      %p423 = pneg %p297
      %p424 = pneg %p294
      %p425 = pneg %p323
      %p426 = pneg %p320
      %s427 = smul.u32 64, %s24
      %p428 = scmp.lt.s32.totalorder %s427, 127
      %s429 = scalar_select %p428, %s427, 127
      %s430 = smul.addr %s429, 8
      %s431 = scalar_lea.vmem %s13, %s430
      %s432 = smul.u32 64, %s24
      %p433 = scmp.lt.s32.totalorder %s432, 127
      %s434 = scalar_select %p433, %s432, 127
      %s435 = smul.addr %s434, 8
      %s436 = scalar_lea.vmem %s0, %s435
      %s437 = smul.u32 64, %s24
      %s438 = smul.u32 64, %s24
      %p439 = scmp.lt.s32.totalorder %s438, 127
      %s440 = scalar_select %p439, %s438, 127
      %s441 = smul.addr %s440, 8
      %s442 = scalar_lea.vmem %s13, %s441
      %s443 = smul.u32 64, %s24
      %v445 = vld [vmem:[%s1] sm:$0x3]
      %v446 = vld [vmem:[%s3] sm:$0x7]
      %v447 = vld [vmem:[%s5] sm:$0xf]
      %v448 = vld [vmem:[%s5 + $0x4] sm:$0x3]
      %v449 = vld [vmem:[%s7] sm:$0xf]
      %v450 = vld [vmem:[%s7 + $0x4] sm:$0xf]
      %v451 = vld [vmem:[%s7 + $0x8] sm:$0xf]
      %v452 = vld [vmem:[%s9] sm:$0xf]
      %v453 = vld [vmem:[%s11] sm:$0x3]
      %v454 = vld [vmem:[%s2] sm:$0x1]
      %v455 = vld [vmem:[%s4] sm:$0x1]
      %v456 = vld [vmem:[%s6] sm:$0x1]
      %v457 = vld [vmem:[%s8] sm:$0x1]
      %v458 = vld [vmem:[%s10] sm:$0x1]
      %v459 = vld [vmem:[%s12] sm:$0x1]
      loop: start=0, step=1, limit=2
      $region73: #{tpu_custom_call.1} parent=71 // loop_pre_header
        _
      $region74: #{tpu_custom_call.1} parent=71 // loop_header
        %s461 = sphi 0, %s465
        %p462 = scmp.ge.s32.totalorder %s461, 2
      $region75: #{tpu_custom_call.1} parent=71 // loop_header_branch
        %464 = sbr.rel (%p462) target = $region79
      $region76: #{tpu_custom_call.1} parent=71 // loop_body
        %s466 = smul.u32 %s461, 256
        %s467 = scalar_lea.vmem %s436, %s466
        %v468 = vld [vmem:[%s467] sm:$0xff]
        %v469 = vld [vmem:[%s467 + $0x8] sm:$0xff]
        %v470 = vld [vmem:[%s467 + $0x10] sm:$0xff]
        %v471 = vld [vmem:[%s467 + $0x18] sm:$0xff]
        %v472 = vld [vmem:[%s467 + $0x20] sm:$0xff]
        %v473 = vld [vmem:[%s467 + $0x28] sm:$0xff]
        %v474 = vld [vmem:[%s467 + $0x30] sm:$0xff]
        %v475 = vld [vmem:[%s467 + $0x38] sm:$0xff]
        %v476 = vld [vmem:[%s467 + $0x40] sm:$0xff]
        %v477 = vld [vmem:[%s467 + $0x48] sm:$0xff]
        %v478 = vld [vmem:[%s467 + $0x50] sm:$0xff]
        %v479 = vld [vmem:[%s467 + $0x58] sm:$0xff]
        %v480 = vld [vmem:[%s467 + $0x60] sm:$0xff]
        %v481 = vld [vmem:[%s467 + $0x68] sm:$0xff]
        %v482 = vld [vmem:[%s467 + $0x70] sm:$0xff]
        %v483 = vld [vmem:[%s467 + $0x78] sm:$0xff]
        %v484 = vld [vmem:[%s467 + $0x80] sm:$0xff]
        %v485 = vld [vmem:[%s467 + $0x88] sm:$0xff]
        %v486 = vld [vmem:[%s467 + $0x90] sm:$0xff]
        %v487 = vld [vmem:[%s467 + $0x98] sm:$0xff]
        %v488 = vld [vmem:[%s467 + $0xa0] sm:$0xff]
        %v489 = vld [vmem:[%s467 + $0xa8] sm:$0xff]
        %v490 = vld [vmem:[%s467 + $0xb0] sm:$0xff]
        %v491 = vld [vmem:[%s467 + $0xb8] sm:$0xff]
        %v492 = vld [vmem:[%s467 + $0xc0] sm:$0xff]
        %v493 = vld [vmem:[%s467 + $0xc8] sm:$0xff]
        %v494 = vld [vmem:[%s467 + $0xd0] sm:$0xff]
        %v495 = vld [vmem:[%s467 + $0xd8] sm:$0xff]
        %v496 = vld [vmem:[%s467 + $0xe0] sm:$0xff]
        %v497 = vld [vmem:[%s467 + $0xe8] sm:$0xff]
        %v498 = vld [vmem:[%s467 + $0xf0] sm:$0xff]
        %v499 = vld [vmem:[%s467 + $0xf8] sm:$0xff]
        %v500 = vpack.c.bf16 %v469, %v468
        %v501 = vpack.c.bf16 %v471, %v470
        %v502 = vpack.c.bf16 %v473, %v472
        %v503 = vpack.c.bf16 %v475, %v474
        %v504 = vpack.c.bf16 %v477, %v476
        %v505 = vpack.c.bf16 %v479, %v478
        %v506 = vpack.c.bf16 %v481, %v480
        %v507 = vpack.c.bf16 %v483, %v482
        %v508 = vpack.c.bf16 %v485, %v484
        %v509 = vpack.c.bf16 %v487, %v486
        %v510 = vpack.c.bf16 %v489, %v488
        %v511 = vpack.c.bf16 %v491, %v490
        %v512 = vpack.c.bf16 %v493, %v492
        %v513 = vpack.c.bf16 %v495, %v494
        %v514 = vpack.c.bf16 %v497, %v496
        %v515 = vpack.c.bf16 %v499, %v498
        %v517 = vlaneseq
        %v518 = vshrl.u32 %v517, 7
        %v519 = vsub.s32 0, %v518
        %v520 = vrot.slane %v454, %v519
        %vm522 = vcmask 23552
        %v524 = vsel %vm522, %v500, 0
        %v527 = vsel %vm522, %v501, 0
        %v530 = vsel %vm522, %v502, 0
        %v533 = vsel %vm522, %v503, 0
        %v536 = vsel %vm522, %v504, 0
        %v539 = vsel %vm522, %v505, 0
        %v542 = vsel %vm522, %v506, 0
        %v545 = vsel %vm522, %v507, 0
        %v548 = vsel %vm522, %v508, 0
        %v551 = vsel %vm522, %v509, 0
        %v554 = vsel %vm522, %v510, 0
        %v557 = vsel %vm522, %v511, 0
        %v560 = vsel %vm522, %v512, 0
        %v563 = vsel %vm522, %v513, 0
        %v566 = vsel %vm522, %v514, 0
        %v569 = vsel %vm522, %v515, 0
        %vm571 = vcmask 1040384
        %vm572 = vcmask 1041408
        %v573 = vsel %vm571, 4294967295, 65535
        %v574 = vsel %vm572, %v573, 0
        %v576 = vand.u32 %v445, %v574
        %578 = vmatprep.subr.bf16.mxu0 0
        %579 = vmatpush1.bf16.msra.mxu0 %v576
        %580 = vmatprep.subr.bf16.mxu0 0
        %581 = vmatpush1.bf16.msra.mxu0 0
        %582 = vmatprep.subr.bf16.mxu0 0
        %583 = vmatpush1.bf16.msra.mxu0 0
        %584 = vmatprep.subr.bf16.mxu0 0
        %585 = vmatpush1.bf16.msra.mxu0 0
        %586 = vmatprep.subr.bf16.mxu0 0
        %587 = vmatpush1.bf16.msra.mxu0 0
        %588 = vmatprep.subr.bf16.mxu0 0
        %589 = vmatpush1.bf16.msra.mxu0 0
        %590 = vmatprep.subr.bf16.mxu0 0
        %591 = vmatpush1.bf16.msra.mxu0 0
        %592 = vmatprep.subr.bf16.mxu0 0
        %593 = vmatpush1.bf16.msra.mxu0 0
        %594 = vmatprep.subr.bf16.mxu0 0
        %595 = vmatpush1.bf16.msra.mxu0 0
        %596 = vmatprep.subr.bf16.mxu0 0
        %597 = vmatpush1.bf16.msra.mxu0 0
        %598 = vmatprep.subr.bf16.mxu0 0
        %599 = vmatpush1.bf16.msra.mxu0 0
        %600 = vmatprep.subr.bf16.mxu0 0
        %601 = vmatpush1.bf16.msra.mxu0 0
        %602 = vmatprep.subr.bf16.mxu0 0
        %603 = vmatpush1.bf16.msra.mxu0 0
        %604 = vmatprep.subr.bf16.mxu0 0
        %605 = vmatpush1.bf16.msra.mxu0 0
        %606 = vmatprep.subr.bf16.mxu0 0
        %607 = vmatpush1.bf16.msra.mxu0 0
        %608 = vmatprep.subr.bf16.mxu0 0
        %609 = vmatpush1.bf16.msra.mxu0 0
        %610 = vmatprep.mubr.bf16.mxu0 0
        %611 = vmatmul.mubr.bf16.gmra.mrb[0].mxu0 %v524
        %v612 = vpop.f32.mrb[0].mxu0
        %v613 = vadd.f32 %v520, %v612
        %v614 = vpop.f32.mrb[0].mxu0
        %v615 = vpop.f32.mrb[0].mxu0
        %v616 = vadd.f32 %v520, %v615
        %v617 = vpop.f32.mrb[0].mxu0
        %618 = vmatprep.mubr.bf16.mxu0 0
        %619 = vmatmul.mubr.bf16.gmra.mrb[0].mxu0 %v527
        %v620 = vpop.f32.mrb[0].mxu0
        %v621 = vadd.f32 %v520, %v620
        %v622 = vpop.f32.mrb[0].mxu0
        %v623 = vpop.f32.mrb[0].mxu0
        %v624 = vadd.f32 %v520, %v623
        %v625 = vpop.f32.mrb[0].mxu0
        %626 = vmatprep.mubr.bf16.mxu0 0
        %627 = vmatmul.mubr.bf16.gmra.mrb[0].mxu0 %v530
        %v628 = vpop.f32.mrb[0].mxu0
        %v629 = vadd.f32 %v520, %v628
        %v630 = vpop.f32.mrb[0].mxu0
        %v631 = vpop.f32.mrb[0].mxu0
        %v632 = vadd.f32 %v520, %v631
        %v633 = vpop.f32.mrb[0].mxu0
        %634 = vmatprep.mubr.bf16.mxu0 0
        %635 = vmatmul.mubr.bf16.gmra.mrb[0].mxu0 %v533
        %v636 = vpop.f32.mrb[0].mxu0
        %v637 = vadd.f32 %v520, %v636
        %v638 = vpop.f32.mrb[0].mxu0
        %v639 = vpop.f32.mrb[0].mxu0
        %v640 = vadd.f32 %v520, %v639
        %v641 = vpop.f32.mrb[0].mxu0
        %642 = vmatprep.mubr.bf16.mxu0 0
        %643 = vmatmul.mubr.bf16.gmra.mrb[0].mxu0 %v536
        %v644 = vpop.f32.mrb[0].mxu0
        %v645 = vadd.f32 %v520, %v644
        %v646 = vpop.f32.mrb[0].mxu0
        %v647 = vpop.f32.mrb[0].mxu0
        %v648 = vadd.f32 %v520, %v647
        %v649 = vpop.f32.mrb[0].mxu0
        %650 = vmatprep.mubr.bf16.mxu0 0
        %651 = vmatmul.mubr.bf16.gmra.mrb[0].mxu0 %v539
        %v652 = vpop.f32.mrb[0].mxu0
        %v653 = vadd.f32 %v520, %v652
        %v654 = vpop.f32.mrb[0].mxu0
        %v655 = vpop.f32.mrb[0].mxu0
        %v656 = vadd.f32 %v520, %v655
        %v657 = vpop.f32.mrb[0].mxu0
        %658 = vmatprep.mubr.bf16.mxu0 0
        %659 = vmatmul.mubr.bf16.gmra.mrb[0].mxu0 %v542
        %v660 = vpop.f32.mrb[0].mxu0
        %v661 = vadd.f32 %v520, %v660
        %v662 = vpop.f32.mrb[0].mxu0
        %v663 = vpop.f32.mrb[0].mxu0
        %v664 = vadd.f32 %v520, %v663
        %v665 = vpop.f32.mrb[0].mxu0
        %666 = vmatprep.mubr.bf16.mxu0 0
        %667 = vmatmul.mubr.bf16.gmra.mrb[0].mxu0 %v545
        %v668 = vpop.f32.mrb[0].mxu0
        %v669 = vadd.f32 %v520, %v668
        %v670 = vpop.f32.mrb[0].mxu0
        %v671 = vpop.f32.mrb[0].mxu0
        %v672 = vadd.f32 %v520, %v671
        %v673 = vpop.f32.mrb[0].mxu0
        %674 = vmatprep.mubr.bf16.mxu0 0
        %675 = vmatmul.mubr.bf16.gmra.mrb[0].mxu0 %v548
        %v676 = vpop.f32.mrb[0].mxu0
        %v677 = vadd.f32 %v520, %v676
        %v678 = vpop.f32.mrb[0].mxu0
        %v679 = vpop.f32.mrb[0].mxu0
        %v680 = vadd.f32 %v520, %v679
        %v681 = vpop.f32.mrb[0].mxu0
        %682 = vmatprep.mubr.bf16.mxu0 0
        %683 = vmatmul.mubr.bf16.gmra.mrb[0].mxu0 %v551
        %v684 = vpop.f32.mrb[0].mxu0
        %v685 = vadd.f32 %v520, %v684
        %v686 = vpop.f32.mrb[0].mxu0
        %v687 = vpop.f32.mrb[0].mxu0
        %v688 = vadd.f32 %v520, %v687
        %v689 = vpop.f32.mrb[0].mxu0
        %690 = vmatprep.mubr.bf16.mxu0 0
        %691 = vmatmul.mubr.bf16.gmra.mrb[0].mxu0 %v554
        %v692 = vpop.f32.mrb[0].mxu0
        %v693 = vadd.f32 %v520, %v692
        %v694 = vpop.f32.mrb[0].mxu0
        %v695 = vpop.f32.mrb[0].mxu0
        %v696 = vadd.f32 %v520, %v695
        %v697 = vpop.f32.mrb[0].mxu0
        %698 = vmatprep.mubr.bf16.mxu0 0
        %699 = vmatmul.mubr.bf16.gmra.mrb[0].mxu0 %v557
        %v700 = vpop.f32.mrb[0].mxu0
        %v701 = vadd.f32 %v520, %v700
        %v702 = vpop.f32.mrb[0].mxu0
        %v703 = vpop.f32.mrb[0].mxu0
        %v704 = vadd.f32 %v520, %v703
        %v705 = vpop.f32.mrb[0].mxu0
        %706 = vmatprep.mubr.bf16.mxu0 0
        %707 = vmatmul.mubr.bf16.gmra.mrb[0].mxu0 %v560
        %v708 = vpop.f32.mrb[0].mxu0
        %v709 = vadd.f32 %v520, %v708
        %v710 = vpop.f32.mrb[0].mxu0
        %v711 = vpop.f32.mrb[0].mxu0
        %v712 = vadd.f32 %v520, %v711
        %v713 = vpop.f32.mrb[0].mxu0
        %714 = vmatprep.mubr.bf16.mxu0 0
        %715 = vmatmul.mubr.bf16.gmra.mrb[0].mxu0 %v563
        %v716 = vpop.f32.mrb[0].mxu0
        %v717 = vadd.f32 %v520, %v716
        %v718 = vpop.f32.mrb[0].mxu0
        %v719 = vpop.f32.mrb[0].mxu0
        %v720 = vadd.f32 %v520, %v719
        %v721 = vpop.f32.mrb[0].mxu0
        %722 = vmatprep.mubr.bf16.mxu0 0
        %723 = vmatmul.mubr.bf16.gmra.mrb[0].mxu0 %v566
        %v724 = vpop.f32.mrb[0].mxu0
        %v725 = vadd.f32 %v520, %v724
        %v726 = vpop.f32.mrb[0].mxu0
        %v727 = vpop.f32.mrb[0].mxu0
        %v728 = vadd.f32 %v520, %v727
        %v729 = vpop.f32.mrb[0].mxu0
        %730 = vmatprep.mubr.bf16.mxu0 0
        %731 = vmatmul.mubr.bf16.gmra.mrb[0].mxu0 %v569
        %v732 = vpop.f32.mrb[0].mxu0
        %v733 = vadd.f32 %v520, %v732
        %v734 = vpop.f32.mrb[0].mxu0
        %v735 = vpop.f32.mrb[0].mxu0
        %v736 = vadd.f32 %v520, %v735
        %v737 = vpop.f32.mrb[0].mxu0
        %738 = vdwg.mxu0
        %v739 = vmax.f32 %v613, 0.0
        %v740 = vmax.f32 %v616, 0.0
        %v741 = vmax.f32 %v621, 0.0
        %v742 = vmax.f32 %v624, 0.0
        %v743 = vmax.f32 %v629, 0.0
        %v744 = vmax.f32 %v632, 0.0
        %v745 = vmax.f32 %v637, 0.0
        %v746 = vmax.f32 %v640, 0.0
        %v747 = vmax.f32 %v645, 0.0
        %v748 = vmax.f32 %v648, 0.0
        %v749 = vmax.f32 %v653, 0.0
        %v750 = vmax.f32 %v656, 0.0
        %v751 = vmax.f32 %v661, 0.0
        %v752 = vmax.f32 %v664, 0.0
        %v753 = vmax.f32 %v669, 0.0
        %v754 = vmax.f32 %v672, 0.0
        %v755 = vmax.f32 %v677, 0.0
        %v756 = vmax.f32 %v680, 0.0
        %v757 = vmax.f32 %v685, 0.0
        %v758 = vmax.f32 %v688, 0.0
        %v759 = vmax.f32 %v693, 0.0
        %v760 = vmax.f32 %v696, 0.0
        %v761 = vmax.f32 %v701, 0.0
        %v762 = vmax.f32 %v704, 0.0
        %v763 = vmax.f32 %v709, 0.0
        %v764 = vmax.f32 %v712, 0.0
        %v765 = vmax.f32 %v717, 0.0
        %v766 = vmax.f32 %v720, 0.0
        %v767 = vmax.f32 %v725, 0.0
        %v768 = vmax.f32 %v728, 0.0
        %v769 = vmax.f32 %v733, 0.0
        %v770 = vmax.f32 %v736, 0.0
        %v771 = vpack.c.bf16 %v740, %v739
        %v772 = vpack.c.bf16 %v742, %v741
        %v773 = vpack.c.bf16 %v744, %v743
        %v774 = vpack.c.bf16 %v746, %v745
        %v775 = vpack.c.bf16 %v748, %v747
        %v776 = vpack.c.bf16 %v750, %v749
        %v777 = vpack.c.bf16 %v752, %v751
        %v778 = vpack.c.bf16 %v754, %v753
        %v779 = vpack.c.bf16 %v756, %v755
        %v780 = vpack.c.bf16 %v758, %v757
        %v781 = vpack.c.bf16 %v760, %v759
        %v782 = vpack.c.bf16 %v762, %v761
        %v783 = vpack.c.bf16 %v764, %v763
        %v784 = vpack.c.bf16 %v766, %v765
        %v785 = vpack.c.bf16 %v768, %v767
        %v786 = vpack.c.bf16 %v770, %v769
        %v788 = vlaneseq
        %v789 = vshrl.u32 %v788, 7
        %v790 = vsub.s32 0, %v789
        %v791 = vrot.slane %v455, %v790
        %vm793 = vcmask 48128
        %v795 = vsel %vm793, %v771, 0
        %v798 = vsel %vm793, %v772, 0
        %v801 = vsel %vm793, %v773, 0
        %v804 = vsel %vm793, %v774, 0
        %v807 = vsel %vm793, %v775, 0
        %v810 = vsel %vm793, %v776, 0
        %v813 = vsel %vm793, %v777, 0
        %v816 = vsel %vm793, %v778, 0
        %v819 = vsel %vm793, %v779, 0
        %v822 = vsel %vm793, %v780, 0
        %v825 = vsel %vm793, %v781, 0
        %v828 = vsel %vm793, %v782, 0
        %v831 = vsel %vm793, %v783, 0
        %v834 = vsel %vm793, %v784, 0
        %v837 = vsel %vm793, %v785, 0
        %v840 = vsel %vm793, %v786, 0
        %vm842 = vcmask 1042432
        %v844 = vsel %vm842, %v446, 0
        %846 = vmatprep.subr.bf16.mxu0 0
        %847 = vmatpush1.bf16.msra.mxu0 %v844
        %848 = vmatprep.subr.bf16.mxu0 0
        %849 = vmatpush1.bf16.msra.mxu0 0
        %850 = vmatprep.subr.bf16.mxu0 0
        %851 = vmatpush1.bf16.msra.mxu0 0
        %852 = vmatprep.subr.bf16.mxu0 0
        %853 = vmatpush1.bf16.msra.mxu0 0
        %854 = vmatprep.subr.bf16.mxu0 0
        %855 = vmatpush1.bf16.msra.mxu0 0
        %856 = vmatprep.subr.bf16.mxu0 0
        %857 = vmatpush1.bf16.msra.mxu0 0
        %858 = vmatprep.subr.bf16.mxu0 0
        %859 = vmatpush1.bf16.msra.mxu0 0
        %860 = vmatprep.subr.bf16.mxu0 0
        %861 = vmatpush1.bf16.msra.mxu0 0
        %862 = vmatprep.subr.bf16.mxu0 0
        %863 = vmatpush1.bf16.msra.mxu0 0
        %864 = vmatprep.subr.bf16.mxu0 0
        %865 = vmatpush1.bf16.msra.mxu0 0
        %866 = vmatprep.subr.bf16.mxu0 0
        %867 = vmatpush1.bf16.msra.mxu0 0
        %868 = vmatprep.subr.bf16.mxu0 0
        %869 = vmatpush1.bf16.msra.mxu0 0
        %870 = vmatprep.subr.bf16.mxu0 0
        %871 = vmatpush1.bf16.msra.mxu0 0
        %872 = vmatprep.subr.bf16.mxu0 0
        %873 = vmatpush1.bf16.msra.mxu0 0
        %874 = vmatprep.subr.bf16.mxu0 0
        %875 = vmatpush1.bf16.msra.mxu0 0
        %876 = vmatprep.subr.bf16.mxu0 0
        %877 = vmatpush1.bf16.msra.mxu0 0
        %878 = vmatprep.mubr.bf16.mxu0 0
        %879 = vmatmul.mubr.bf16.gmra.mrb[0].mxu0 %v795
        %v880 = vpop.f32.mrb[0].mxu0
        %v881 = vadd.f32 %v791, %v880
        %v882 = vpop.f32.mrb[0].mxu0
        %v883 = vpop.f32.mrb[0].mxu0
        %v884 = vadd.f32 %v791, %v883
        %v885 = vpop.f32.mrb[0].mxu0
        %886 = vmatprep.mubr.bf16.mxu0 0
        %887 = vmatmul.mubr.bf16.gmra.mrb[0].mxu0 %v798
        %v888 = vpop.f32.mrb[0].mxu0
        %v889 = vadd.f32 %v791, %v888
        %v890 = vpop.f32.mrb[0].mxu0
        %v891 = vpop.f32.mrb[0].mxu0
        %v892 = vadd.f32 %v791, %v891
        %v893 = vpop.f32.mrb[0].mxu0
        %894 = vmatprep.mubr.bf16.mxu0 0
        %895 = vmatmul.mubr.bf16.gmra.mrb[0].mxu0 %v801
        %v896 = vpop.f32.mrb[0].mxu0
        %v897 = vadd.f32 %v791, %v896
        %v898 = vpop.f32.mrb[0].mxu0
        %v899 = vpop.f32.mrb[0].mxu0
        %v900 = vadd.f32 %v791, %v899
        %v901 = vpop.f32.mrb[0].mxu0
        %902 = vmatprep.mubr.bf16.mxu0 0
        %903 = vmatmul.mubr.bf16.gmra.mrb[0].mxu0 %v804
        %v904 = vpop.f32.mrb[0].mxu0
        %v905 = vadd.f32 %v791, %v904
        %v906 = vpop.f32.mrb[0].mxu0
        %v907 = vpop.f32.mrb[0].mxu0
        %v908 = vadd.f32 %v791, %v907
        %v909 = vpop.f32.mrb[0].mxu0
        %910 = vmatprep.mubr.bf16.mxu0 0
        %911 = vmatmul.mubr.bf16.gmra.mrb[0].mxu0 %v807
        %v912 = vpop.f32.mrb[0].mxu0
        %v913 = vadd.f32 %v791, %v912
        %v914 = vpop.f32.mrb[0].mxu0
        %v915 = vpop.f32.mrb[0].mxu0
        %v916 = vadd.f32 %v791, %v915
        %v917 = vpop.f32.mrb[0].mxu0
        %918 = vmatprep.mubr.bf16.mxu0 0
        %919 = vmatmul.mubr.bf16.gmra.mrb[0].mxu0 %v810
        %v920 = vpop.f32.mrb[0].mxu0
        %v921 = vadd.f32 %v791, %v920
        %v922 = vpop.f32.mrb[0].mxu0
        %v923 = vpop.f32.mrb[0].mxu0
        %v924 = vadd.f32 %v791, %v923
        %v925 = vpop.f32.mrb[0].mxu0
        %926 = vmatprep.mubr.bf16.mxu0 0
        %927 = vmatmul.mubr.bf16.gmra.mrb[0].mxu0 %v813
        %v928 = vpop.f32.mrb[0].mxu0
        %v929 = vadd.f32 %v791, %v928
        %v930 = vpop.f32.mrb[0].mxu0
        %v931 = vpop.f32.mrb[0].mxu0
        %v932 = vadd.f32 %v791, %v931
        %v933 = vpop.f32.mrb[0].mxu0
        %934 = vmatprep.mubr.bf16.mxu0 0
        %935 = vmatmul.mubr.bf16.gmra.mrb[0].mxu0 %v816
        %v936 = vpop.f32.mrb[0].mxu0
        %v937 = vadd.f32 %v791, %v936
        %v938 = vpop.f32.mrb[0].mxu0
        %v939 = vpop.f32.mrb[0].mxu0
        %v940 = vadd.f32 %v791, %v939
        %v941 = vpop.f32.mrb[0].mxu0
        %942 = vmatprep.mubr.bf16.mxu0 0
        %943 = vmatmul.mubr.bf16.gmra.mrb[0].mxu0 %v819
        %v944 = vpop.f32.mrb[0].mxu0
        %v945 = vadd.f32 %v791, %v944
        %v946 = vpop.f32.mrb[0].mxu0
        %v947 = vpop.f32.mrb[0].mxu0
        %v948 = vadd.f32 %v791, %v947
        %v949 = vpop.f32.mrb[0].mxu0
        %950 = vmatprep.mubr.bf16.mxu0 0
        %951 = vmatmul.mubr.bf16.gmra.mrb[0].mxu0 %v822
        %v952 = vpop.f32.mrb[0].mxu0
        %v953 = vadd.f32 %v791, %v952
        %v954 = vpop.f32.mrb[0].mxu0
        %v955 = vpop.f32.mrb[0].mxu0
        %v956 = vadd.f32 %v791, %v955
        %v957 = vpop.f32.mrb[0].mxu0
        %958 = vmatprep.mubr.bf16.mxu0 0
        %959 = vmatmul.mubr.bf16.gmra.mrb[0].mxu0 %v825
        %v960 = vpop.f32.mrb[0].mxu0
        %v961 = vadd.f32 %v791, %v960
        %v962 = vpop.f32.mrb[0].mxu0
        %v963 = vpop.f32.mrb[0].mxu0
        %v964 = vadd.f32 %v791, %v963
        %v965 = vpop.f32.mrb[0].mxu0
        %966 = vmatprep.mubr.bf16.mxu0 0
        %967 = vmatmul.mubr.bf16.gmra.mrb[0].mxu0 %v828
        %v968 = vpop.f32.mrb[0].mxu0
        %v969 = vadd.f32 %v791, %v968
        %v970 = vpop.f32.mrb[0].mxu0
        %v971 = vpop.f32.mrb[0].mxu0
        %v972 = vadd.f32 %v791, %v971
        %v973 = vpop.f32.mrb[0].mxu0
        %974 = vmatprep.mubr.bf16.mxu0 0
        %975 = vmatmul.mubr.bf16.gmra.mrb[0].mxu0 %v831
        %v976 = vpop.f32.mrb[0].mxu0
        %v977 = vadd.f32 %v791, %v976
        %v978 = vpop.f32.mrb[0].mxu0
        %v979 = vpop.f32.mrb[0].mxu0
        %v980 = vadd.f32 %v791, %v979
        %v981 = vpop.f32.mrb[0].mxu0
        %982 = vmatprep.mubr.bf16.mxu0 0
        %983 = vmatmul.mubr.bf16.gmra.mrb[0].mxu0 %v834
        %v984 = vpop.f32.mrb[0].mxu0
        %v985 = vadd.f32 %v791, %v984
        %v986 = vpop.f32.mrb[0].mxu0
        %v987 = vpop.f32.mrb[0].mxu0
        %v988 = vadd.f32 %v791, %v987
        %v989 = vpop.f32.mrb[0].mxu0
        %990 = vmatprep.mubr.bf16.mxu0 0
        %991 = vmatmul.mubr.bf16.gmra.mrb[0].mxu0 %v837
        %v992 = vpop.f32.mrb[0].mxu0
        %v993 = vadd.f32 %v791, %v992
        %v994 = vpop.f32.mrb[0].mxu0
        %v995 = vpop.f32.mrb[0].mxu0
        %v996 = vadd.f32 %v791, %v995
        %v997 = vpop.f32.mrb[0].mxu0
        %998 = vmatprep.mubr.bf16.mxu0 0
        %999 = vmatmul.mubr.bf16.gmra.mrb[0].mxu0 %v840
        %v1000 = vpop.f32.mrb[0].mxu0
        %v1001 = vadd.f32 %v791, %v1000
        %v1002 = vpop.f32.mrb[0].mxu0
        %v1003 = vpop.f32.mrb[0].mxu0
        %v1004 = vadd.f32 %v791, %v1003
        %v1005 = vpop.f32.mrb[0].mxu0
        %1006 = vdwg.mxu0
        %v1007 = vmax.f32 %v881, 0.0
        %v1008 = vmax.f32 %v884, 0.0
        %v1009 = vmax.f32 %v889, 0.0
        %v1010 = vmax.f32 %v892, 0.0
        %v1011 = vmax.f32 %v897, 0.0
        %v1012 = vmax.f32 %v900, 0.0
        %v1013 = vmax.f32 %v905, 0.0
        %v1014 = vmax.f32 %v908, 0.0
        %v1015 = vmax.f32 %v913, 0.0
        %v1016 = vmax.f32 %v916, 0.0
        %v1017 = vmax.f32 %v921, 0.0
        %v1018 = vmax.f32 %v924, 0.0
        %v1019 = vmax.f32 %v929, 0.0
        %v1020 = vmax.f32 %v932, 0.0
        %v1021 = vmax.f32 %v937, 0.0
        %v1022 = vmax.f32 %v940, 0.0
        %v1023 = vmax.f32 %v945, 0.0
        %v1024 = vmax.f32 %v948, 0.0
        %v1025 = vmax.f32 %v953, 0.0
        %v1026 = vmax.f32 %v956, 0.0
        %v1027 = vmax.f32 %v961, 0.0
        %v1028 = vmax.f32 %v964, 0.0
        %v1029 = vmax.f32 %v969, 0.0
        %v1030 = vmax.f32 %v972, 0.0
        %v1031 = vmax.f32 %v977, 0.0
        %v1032 = vmax.f32 %v980, 0.0
        %v1033 = vmax.f32 %v985, 0.0
        %v1034 = vmax.f32 %v988, 0.0
        %v1035 = vmax.f32 %v993, 0.0
        %v1036 = vmax.f32 %v996, 0.0
        %v1037 = vmax.f32 %v1001, 0.0
        %v1038 = vmax.f32 %v1004, 0.0
        %v1039 = vpack.c.bf16 %v1008, %v1007
        %v1040 = vpack.c.bf16 %v1010, %v1009
        %v1041 = vpack.c.bf16 %v1012, %v1011
        %v1042 = vpack.c.bf16 %v1014, %v1013
        %v1043 = vpack.c.bf16 %v1016, %v1015
        %v1044 = vpack.c.bf16 %v1018, %v1017
        %v1045 = vpack.c.bf16 %v1020, %v1019
        %v1046 = vpack.c.bf16 %v1022, %v1021
        %v1047 = vpack.c.bf16 %v1024, %v1023
        %v1048 = vpack.c.bf16 %v1026, %v1025
        %v1049 = vpack.c.bf16 %v1028, %v1027
        %v1050 = vpack.c.bf16 %v1030, %v1029
        %v1051 = vpack.c.bf16 %v1032, %v1031
        %v1052 = vpack.c.bf16 %v1034, %v1033
        %v1053 = vpack.c.bf16 %v1036, %v1035
        %v1054 = vpack.c.bf16 %v1038, %v1037
        %v1056 = vlaneseq
        %v1057 = vshrl.u32 %v1056, 7
        %v1058 = vsub.s32 0, %v1057
        %v1059 = vrot.slane %v456, %v1058
        %v1063 = vunpack.c.l.b16 %v447
        %v1064 = vunpack.c.l.b16 %v448
        %v1065 = vpack.c.b16 %v1064, %v1063
        %vm1066 = vcmask 97280
        %v1068 = vsel %vm1066, %v1039, 0
        %v1071 = vsel %vm1066, %v1040, 0
        %v1074 = vsel %vm1066, %v1041, 0
        %v1077 = vsel %vm1066, %v1042, 0
        %v1080 = vsel %vm1066, %v1043, 0
        %v1083 = vsel %vm1066, %v1044, 0
        %v1086 = vsel %vm1066, %v1045, 0
        %v1089 = vsel %vm1066, %v1046, 0
        %v1092 = vsel %vm1066, %v1047, 0
        %v1095 = vsel %vm1066, %v1048, 0
        %v1098 = vsel %vm1066, %v1049, 0
        %v1101 = vsel %vm1066, %v1050, 0
        %v1104 = vsel %vm1066, %v1051, 0
        %v1107 = vsel %vm1066, %v1052, 0
        %v1110 = vsel %vm1066, %v1053, 0
        %v1113 = vsel %vm1066, %v1054, 0
        %vm1115 = vcmask 1045504
        %v1117 = vsel %vm1115, %v1065, 0
        %1119 = vmatprep.subr.bf16.mxu0 0
        %1120 = vmatpush1.bf16.msra.mxu0 %v1117
        %1121 = vmatprep.subr.bf16.mxu0 0
        %1122 = vmatpush1.bf16.msra.mxu0 0
        %1123 = vmatprep.subr.bf16.mxu0 0
        %1124 = vmatpush1.bf16.msra.mxu0 0
        %1125 = vmatprep.subr.bf16.mxu0 0
        %1126 = vmatpush1.bf16.msra.mxu0 0
        %1127 = vmatprep.subr.bf16.mxu0 0
        %1128 = vmatpush1.bf16.msra.mxu0 0
        %1129 = vmatprep.subr.bf16.mxu0 0
        %1130 = vmatpush1.bf16.msra.mxu0 0
        %1131 = vmatprep.subr.bf16.mxu0 0
        %1132 = vmatpush1.bf16.msra.mxu0 0
        %1133 = vmatprep.subr.bf16.mxu0 0
        %1134 = vmatpush1.bf16.msra.mxu0 0
        %1135 = vmatprep.subr.bf16.mxu0 0
        %1136 = vmatpush1.bf16.msra.mxu0 0
        %1137 = vmatprep.subr.bf16.mxu0 0
        %1138 = vmatpush1.bf16.msra.mxu0 0
        %1139 = vmatprep.subr.bf16.mxu0 0
        %1140 = vmatpush1.bf16.msra.mxu0 0
        %1141 = vmatprep.subr.bf16.mxu0 0
        %1142 = vmatpush1.bf16.msra.mxu0 0
        %1143 = vmatprep.subr.bf16.mxu0 0
        %1144 = vmatpush1.bf16.msra.mxu0 0
        %1145 = vmatprep.subr.bf16.mxu0 0
        %1146 = vmatpush1.bf16.msra.mxu0 0
        %1147 = vmatprep.subr.bf16.mxu0 0
        %1148 = vmatpush1.bf16.msra.mxu0 0
        %1149 = vmatprep.subr.bf16.mxu0 0
        %1150 = vmatpush1.bf16.msra.mxu0 0
        %1151 = vmatprep.mubr.bf16.mxu0 0
        %1152 = vmatmul.mubr.bf16.gmra.mrb[0].mxu0 %v1068
        %v1153 = vpop.f32.mrb[0].mxu0
        %v1154 = vadd.f32 %v1059, %v1153
        %v1155 = vpop.f32.mrb[0].mxu0
        %v1156 = vpop.f32.mrb[0].mxu0
        %v1157 = vadd.f32 %v1059, %v1156
        %v1158 = vpop.f32.mrb[0].mxu0
        %1159 = vmatprep.mubr.bf16.mxu0 0
        %1160 = vmatmul.mubr.bf16.gmra.mrb[0].mxu0 %v1071
        %v1161 = vpop.f32.mrb[0].mxu0
        %v1162 = vadd.f32 %v1059, %v1161
        %v1163 = vpop.f32.mrb[0].mxu0
        %v1164 = vpop.f32.mrb[0].mxu0
        %v1165 = vadd.f32 %v1059, %v1164
        %v1166 = vpop.f32.mrb[0].mxu0
        %1167 = vmatprep.mubr.bf16.mxu0 0
        %1168 = vmatmul.mubr.bf16.gmra.mrb[0].mxu0 %v1074
        %v1169 = vpop.f32.mrb[0].mxu0
        %v1170 = vadd.f32 %v1059, %v1169
        %v1171 = vpop.f32.mrb[0].mxu0
        %v1172 = vpop.f32.mrb[0].mxu0
        %v1173 = vadd.f32 %v1059, %v1172
        %v1174 = vpop.f32.mrb[0].mxu0
        %1175 = vmatprep.mubr.bf16.mxu0 0
        %1176 = vmatmul.mubr.bf16.gmra.mrb[0].mxu0 %v1077
        %v1177 = vpop.f32.mrb[0].mxu0
        %v1178 = vadd.f32 %v1059, %v1177
        %v1179 = vpop.f32.mrb[0].mxu0
        %v1180 = vpop.f32.mrb[0].mxu0
        %v1181 = vadd.f32 %v1059, %v1180
        %v1182 = vpop.f32.mrb[0].mxu0
        %1183 = vmatprep.mubr.bf16.mxu0 0
        %1184 = vmatmul.mubr.bf16.gmra.mrb[0].mxu0 %v1080
        %v1185 = vpop.f32.mrb[0].mxu0
        %v1186 = vadd.f32 %v1059, %v1185
        %v1187 = vpop.f32.mrb[0].mxu0
        %v1188 = vpop.f32.mrb[0].mxu0
        %v1189 = vadd.f32 %v1059, %v1188
        %v1190 = vpop.f32.mrb[0].mxu0
        %1191 = vmatprep.mubr.bf16.mxu0 0
        %1192 = vmatmul.mubr.bf16.gmra.mrb[0].mxu0 %v1083
        %v1193 = vpop.f32.mrb[0].mxu0
        %v1194 = vadd.f32 %v1059, %v1193
        %v1195 = vpop.f32.mrb[0].mxu0
        %v1196 = vpop.f32.mrb[0].mxu0
        %v1197 = vadd.f32 %v1059, %v1196
        %v1198 = vpop.f32.mrb[0].mxu0
        %1199 = vmatprep.mubr.bf16.mxu0 0
        %1200 = vmatmul.mubr.bf16.gmra.mrb[0].mxu0 %v1086
        %v1201 = vpop.f32.mrb[0].mxu0
        %v1202 = vadd.f32 %v1059, %v1201
        %v1203 = vpop.f32.mrb[0].mxu0
        %v1204 = vpop.f32.mrb[0].mxu0
        %v1205 = vadd.f32 %v1059, %v1204
        %v1206 = vpop.f32.mrb[0].mxu0
        %1207 = vmatprep.mubr.bf16.mxu0 0
        %1208 = vmatmul.mubr.bf16.gmra.mrb[0].mxu0 %v1089
        %v1209 = vpop.f32.mrb[0].mxu0
        %v1210 = vadd.f32 %v1059, %v1209
        %v1211 = vpop.f32.mrb[0].mxu0
        %v1212 = vpop.f32.mrb[0].mxu0
        %v1213 = vadd.f32 %v1059, %v1212
        %v1214 = vpop.f32.mrb[0].mxu0
        %1215 = vmatprep.mubr.bf16.mxu0 0
        %1216 = vmatmul.mubr.bf16.gmra.mrb[0].mxu0 %v1092
        %v1217 = vpop.f32.mrb[0].mxu0
        %v1218 = vadd.f32 %v1059, %v1217
        %v1219 = vpop.f32.mrb[0].mxu0
        %v1220 = vpop.f32.mrb[0].mxu0
        %v1221 = vadd.f32 %v1059, %v1220
        %v1222 = vpop.f32.mrb[0].mxu0
        %1223 = vmatprep.mubr.bf16.mxu0 0
        %1224 = vmatmul.mubr.bf16.gmra.mrb[0].mxu0 %v1095
        %v1225 = vpop.f32.mrb[0].mxu0
        %v1226 = vadd.f32 %v1059, %v1225
        %v1227 = vpop.f32.mrb[0].mxu0
        %v1228 = vpop.f32.mrb[0].mxu0
        %v1229 = vadd.f32 %v1059, %v1228
        %v1230 = vpop.f32.mrb[0].mxu0
        %1231 = vmatprep.mubr.bf16.mxu0 0
        %1232 = vmatmul.mubr.bf16.gmra.mrb[0].mxu0 %v1098
        %v1233 = vpop.f32.mrb[0].mxu0
        %v1234 = vadd.f32 %v1059, %v1233
        %v1235 = vpop.f32.mrb[0].mxu0
        %v1236 = vpop.f32.mrb[0].mxu0
        %v1237 = vadd.f32 %v1059, %v1236
        %v1238 = vpop.f32.mrb[0].mxu0
        %1239 = vmatprep.mubr.bf16.mxu0 0
        %1240 = vmatmul.mubr.bf16.gmra.mrb[0].mxu0 %v1101
        %v1241 = vpop.f32.mrb[0].mxu0
        %v1242 = vadd.f32 %v1059, %v1241
        %v1243 = vpop.f32.mrb[0].mxu0
        %v1244 = vpop.f32.mrb[0].mxu0
        %v1245 = vadd.f32 %v1059, %v1244
        %v1246 = vpop.f32.mrb[0].mxu0
        %1247 = vmatprep.mubr.bf16.mxu0 0
        %1248 = vmatmul.mubr.bf16.gmra.mrb[0].mxu0 %v1104
        %v1249 = vpop.f32.mrb[0].mxu0
        %v1250 = vadd.f32 %v1059, %v1249
        %v1251 = vpop.f32.mrb[0].mxu0
        %v1252 = vpop.f32.mrb[0].mxu0
        %v1253 = vadd.f32 %v1059, %v1252
        %v1254 = vpop.f32.mrb[0].mxu0
        %1255 = vmatprep.mubr.bf16.mxu0 0
        %1256 = vmatmul.mubr.bf16.gmra.mrb[0].mxu0 %v1107
        %v1257 = vpop.f32.mrb[0].mxu0
        %v1258 = vadd.f32 %v1059, %v1257
        %v1259 = vpop.f32.mrb[0].mxu0
        %v1260 = vpop.f32.mrb[0].mxu0
        %v1261 = vadd.f32 %v1059, %v1260
        %v1262 = vpop.f32.mrb[0].mxu0
        %1263 = vmatprep.mubr.bf16.mxu0 0
        %1264 = vmatmul.mubr.bf16.gmra.mrb[0].mxu0 %v1110
        %v1265 = vpop.f32.mrb[0].mxu0
        %v1266 = vadd.f32 %v1059, %v1265
        %v1267 = vpop.f32.mrb[0].mxu0
        %v1268 = vpop.f32.mrb[0].mxu0
        %v1269 = vadd.f32 %v1059, %v1268
        %v1270 = vpop.f32.mrb[0].mxu0
        %1271 = vmatprep.mubr.bf16.mxu0 0
        %1272 = vmatmul.mubr.bf16.gmra.mrb[0].mxu0 %v1113
        %v1273 = vpop.f32.mrb[0].mxu0
        %v1274 = vadd.f32 %v1059, %v1273
        %v1275 = vpop.f32.mrb[0].mxu0
        %v1276 = vpop.f32.mrb[0].mxu0
        %v1277 = vadd.f32 %v1059, %v1276
        %v1278 = vpop.f32.mrb[0].mxu0
        %1279 = vdwg.mxu0
        %v1280 = vmax.f32 %v1154, 0.0
        %v1281 = vmax.f32 %v1157, 0.0
        %v1282 = vmax.f32 %v1162, 0.0
        %v1283 = vmax.f32 %v1165, 0.0
        %v1284 = vmax.f32 %v1170, 0.0
        %v1285 = vmax.f32 %v1173, 0.0
        %v1286 = vmax.f32 %v1178, 0.0
        %v1287 = vmax.f32 %v1181, 0.0
        %v1288 = vmax.f32 %v1186, 0.0
        %v1289 = vmax.f32 %v1189, 0.0
        %v1290 = vmax.f32 %v1194, 0.0
        %v1291 = vmax.f32 %v1197, 0.0
        %v1292 = vmax.f32 %v1202, 0.0
        %v1293 = vmax.f32 %v1205, 0.0
        %v1294 = vmax.f32 %v1210, 0.0
        %v1295 = vmax.f32 %v1213, 0.0
        %v1296 = vmax.f32 %v1218, 0.0
        %v1297 = vmax.f32 %v1221, 0.0
        %v1298 = vmax.f32 %v1226, 0.0
        %v1299 = vmax.f32 %v1229, 0.0
        %v1300 = vmax.f32 %v1234, 0.0
        %v1301 = vmax.f32 %v1237, 0.0
        %v1302 = vmax.f32 %v1242, 0.0
        %v1303 = vmax.f32 %v1245, 0.0
        %v1304 = vmax.f32 %v1250, 0.0
        %v1305 = vmax.f32 %v1253, 0.0
        %v1306 = vmax.f32 %v1258, 0.0
        %v1307 = vmax.f32 %v1261, 0.0
        %v1308 = vmax.f32 %v1266, 0.0
        %v1309 = vmax.f32 %v1269, 0.0
        %v1310 = vmax.f32 %v1274, 0.0
        %v1311 = vmax.f32 %v1277, 0.0
        %v1312 = vpack.c.bf16 %v1281, %v1280
        %v1313 = vpack.c.bf16 %v1283, %v1282
        %v1314 = vpack.c.bf16 %v1285, %v1284
        %v1315 = vpack.c.bf16 %v1287, %v1286
        %v1316 = vpack.c.bf16 %v1289, %v1288
        %v1317 = vpack.c.bf16 %v1291, %v1290
        %v1318 = vpack.c.bf16 %v1293, %v1292
        %v1319 = vpack.c.bf16 %v1295, %v1294
        %v1320 = vpack.c.bf16 %v1297, %v1296
        %v1321 = vpack.c.bf16 %v1299, %v1298
        %v1322 = vpack.c.bf16 %v1301, %v1300
        %v1323 = vpack.c.bf16 %v1303, %v1302
        %v1324 = vpack.c.bf16 %v1305, %v1304
        %v1325 = vpack.c.bf16 %v1307, %v1306
        %v1326 = vpack.c.bf16 %v1309, %v1308
        %v1327 = vpack.c.bf16 %v1311, %v1310
        %v1329 = vlaneseq
        %v1330 = vshrl.u32 %v1329, 7
        %v1331 = vsub.s32 0, %v1330
        %v1332 = vrot.slane %v457, %v1331
        %v1337 = vunpack.c.l.b16 %v449
        %v1338 = vunpack.c.l.b16 %v450
        %v1339 = vunpack.c.l.b16 %v451
        %v1340 = vpack.c.b16 %v1338, %v1337
        %v1341 = vpack.c.b16 %v1339, %v1339
        %vm1343 = vcmask 195584
        %v1345 = vsel %vm1343, %v1312, 0
        %v1348 = vsel %vm1343, %v1313, 0
        %v1351 = vsel %vm1343, %v1314, 0
        %v1354 = vsel %vm1343, %v1315, 0
        %v1357 = vsel %vm1343, %v1316, 0
        %v1360 = vsel %vm1343, %v1317, 0
        %v1363 = vsel %vm1343, %v1318, 0
        %v1366 = vsel %vm1343, %v1319, 0
        %v1369 = vsel %vm1343, %v1320, 0
        %v1372 = vsel %vm1343, %v1321, 0
        %v1375 = vsel %vm1343, %v1322, 0
        %v1378 = vsel %vm1343, %v1323, 0
        %v1381 = vsel %vm1343, %v1324, 0
        %v1384 = vsel %vm1343, %v1325, 0
        %v1387 = vsel %vm1343, %v1326, 0
        %v1390 = vsel %vm1343, %v1327, 0
        %vm1392 = vcmask 1043456
        %v1394 = vsel %vm1392, %v1341, 0
        %1396 = vmatprep.subr.bf16.mxu0 0
        %1397 = vmatpush1.bf16.msra.mxu0 %v1340
        %1398 = vmatprep.subr.bf16.mxu0 0
        %1399 = vmatpush1.bf16.msra.mxu0 %v1394
        %1400 = vmatprep.subr.bf16.mxu0 0
        %1401 = vmatpush1.bf16.msra.mxu0 0
        %1402 = vmatprep.subr.bf16.mxu0 0
        %1403 = vmatpush1.bf16.msra.mxu0 0
        %1404 = vmatprep.subr.bf16.mxu0 0
        %1405 = vmatpush1.bf16.msra.mxu0 0
        %1406 = vmatprep.subr.bf16.mxu0 0
        %1407 = vmatpush1.bf16.msra.mxu0 0
        %1408 = vmatprep.subr.bf16.mxu0 0
        %1409 = vmatpush1.bf16.msra.mxu0 0
        %1410 = vmatprep.subr.bf16.mxu0 0
        %1411 = vmatpush1.bf16.msra.mxu0 0
        %1412 = vmatprep.subr.bf16.mxu0 0
        %1413 = vmatpush1.bf16.msra.mxu0 0
        %1414 = vmatprep.subr.bf16.mxu0 0
        %1415 = vmatpush1.bf16.msra.mxu0 0
        %1416 = vmatprep.subr.bf16.mxu0 0
        %1417 = vmatpush1.bf16.msra.mxu0 0
        %1418 = vmatprep.subr.bf16.mxu0 0
        %1419 = vmatpush1.bf16.msra.mxu0 0
        %1420 = vmatprep.subr.bf16.mxu0 0
        %1421 = vmatpush1.bf16.msra.mxu0 0
        %1422 = vmatprep.subr.bf16.mxu0 0
        %1423 = vmatpush1.bf16.msra.mxu0 0
        %1424 = vmatprep.subr.bf16.mxu0 0
        %1425 = vmatpush1.bf16.msra.mxu0 0
        %1426 = vmatprep.subr.bf16.mxu0 0
        %1427 = vmatpush1.bf16.msra.mxu0 0
        %1428 = vmatprep.mubr.bf16.mxu0 0
        %1429 = vmatmul.mubr.bf16.gmra.mrb[0].mxu0 %v1345
        %v1430 = vpop.f32.mrb[0].mxu0
        %v1431 = vadd.f32 %v1332, %v1430
        %v1432 = vpop.f32.mrb[0].mxu0
        %v1433 = vpop.f32.mrb[0].mxu0
        %v1434 = vadd.f32 %v1332, %v1433
        %v1435 = vpop.f32.mrb[0].mxu0
        %1436 = vmatprep.mubr.bf16.mxu0 0
        %1437 = vmatmul.mubr.bf16.gmra.mrb[0].mxu0 %v1348
        %v1438 = vpop.f32.mrb[0].mxu0
        %v1439 = vadd.f32 %v1332, %v1438
        %v1440 = vpop.f32.mrb[0].mxu0
        %v1441 = vpop.f32.mrb[0].mxu0
        %v1442 = vadd.f32 %v1332, %v1441
        %v1443 = vpop.f32.mrb[0].mxu0
        %1444 = vmatprep.mubr.bf16.mxu0 0
        %1445 = vmatmul.mubr.bf16.gmra.mrb[0].mxu0 %v1351
        %v1446 = vpop.f32.mrb[0].mxu0
        %v1447 = vadd.f32 %v1332, %v1446
        %v1448 = vpop.f32.mrb[0].mxu0
        %v1449 = vpop.f32.mrb[0].mxu0
        %v1450 = vadd.f32 %v1332, %v1449
        %v1451 = vpop.f32.mrb[0].mxu0
        %1452 = vmatprep.mubr.bf16.mxu0 0
        %1453 = vmatmul.mubr.bf16.gmra.mrb[0].mxu0 %v1354
        %v1454 = vpop.f32.mrb[0].mxu0
        %v1455 = vadd.f32 %v1332, %v1454
        %v1456 = vpop.f32.mrb[0].mxu0
        %v1457 = vpop.f32.mrb[0].mxu0
        %v1458 = vadd.f32 %v1332, %v1457
        %v1459 = vpop.f32.mrb[0].mxu0
        %1460 = vmatprep.mubr.bf16.mxu0 0
        %1461 = vmatmul.mubr.bf16.gmra.mrb[0].mxu0 %v1357
        %v1462 = vpop.f32.mrb[0].mxu0
        %v1463 = vadd.f32 %v1332, %v1462
        %v1464 = vpop.f32.mrb[0].mxu0
        %v1465 = vpop.f32.mrb[0].mxu0
        %v1466 = vadd.f32 %v1332, %v1465
        %v1467 = vpop.f32.mrb[0].mxu0
        %1468 = vmatprep.mubr.bf16.mxu0 0
        %1469 = vmatmul.mubr.bf16.gmra.mrb[0].mxu0 %v1360
        %v1470 = vpop.f32.mrb[0].mxu0
        %v1471 = vadd.f32 %v1332, %v1470
        %v1472 = vpop.f32.mrb[0].mxu0
        %v1473 = vpop.f32.mrb[0].mxu0
        %v1474 = vadd.f32 %v1332, %v1473
        %v1475 = vpop.f32.mrb[0].mxu0
        %1476 = vmatprep.mubr.bf16.mxu0 0
        %1477 = vmatmul.mubr.bf16.gmra.mrb[0].mxu0 %v1363
        %v1478 = vpop.f32.mrb[0].mxu0
        %v1479 = vadd.f32 %v1332, %v1478
        %v1480 = vpop.f32.mrb[0].mxu0
        %v1481 = vpop.f32.mrb[0].mxu0
        %v1482 = vadd.f32 %v1332, %v1481
        %v1483 = vpop.f32.mrb[0].mxu0
        %1484 = vmatprep.mubr.bf16.mxu0 0
        %1485 = vmatmul.mubr.bf16.gmra.mrb[0].mxu0 %v1366
        %v1486 = vpop.f32.mrb[0].mxu0
        %v1487 = vadd.f32 %v1332, %v1486
        %v1488 = vpop.f32.mrb[0].mxu0
        %v1489 = vpop.f32.mrb[0].mxu0
        %v1490 = vadd.f32 %v1332, %v1489
        %v1491 = vpop.f32.mrb[0].mxu0
        %1492 = vmatprep.mubr.bf16.mxu0 0
        %1493 = vmatmul.mubr.bf16.gmra.mrb[0].mxu0 %v1369
        %v1494 = vpop.f32.mrb[0].mxu0
        %v1495 = vadd.f32 %v1332, %v1494
        %v1496 = vpop.f32.mrb[0].mxu0
        %v1497 = vpop.f32.mrb[0].mxu0
        %v1498 = vadd.f32 %v1332, %v1497
        %v1499 = vpop.f32.mrb[0].mxu0
        %1500 = vmatprep.mubr.bf16.mxu0 0
        %1501 = vmatmul.mubr.bf16.gmra.mrb[0].mxu0 %v1372
        %v1502 = vpop.f32.mrb[0].mxu0
        %v1503 = vadd.f32 %v1332, %v1502
        %v1504 = vpop.f32.mrb[0].mxu0
        %v1505 = vpop.f32.mrb[0].mxu0
        %v1506 = vadd.f32 %v1332, %v1505
        %v1507 = vpop.f32.mrb[0].mxu0
        %1508 = vmatprep.mubr.bf16.mxu0 0
        %1509 = vmatmul.mubr.bf16.gmra.mrb[0].mxu0 %v1375
        %v1510 = vpop.f32.mrb[0].mxu0
        %v1511 = vadd.f32 %v1332, %v1510
        %v1512 = vpop.f32.mrb[0].mxu0
        %v1513 = vpop.f32.mrb[0].mxu0
        %v1514 = vadd.f32 %v1332, %v1513
        %v1515 = vpop.f32.mrb[0].mxu0
        %1516 = vmatprep.mubr.bf16.mxu0 0
        %1517 = vmatmul.mubr.bf16.gmra.mrb[0].mxu0 %v1378
        %v1518 = vpop.f32.mrb[0].mxu0
        %v1519 = vadd.f32 %v1332, %v1518
        %v1520 = vpop.f32.mrb[0].mxu0
        %v1521 = vpop.f32.mrb[0].mxu0
        %v1522 = vadd.f32 %v1332, %v1521
        %v1523 = vpop.f32.mrb[0].mxu0
        %1524 = vmatprep.mubr.bf16.mxu0 0
        %1525 = vmatmul.mubr.bf16.gmra.mrb[0].mxu0 %v1381
        %v1526 = vpop.f32.mrb[0].mxu0
        %v1527 = vadd.f32 %v1332, %v1526
        %v1528 = vpop.f32.mrb[0].mxu0
        %v1529 = vpop.f32.mrb[0].mxu0
        %v1530 = vadd.f32 %v1332, %v1529
        %v1531 = vpop.f32.mrb[0].mxu0
        %1532 = vmatprep.mubr.bf16.mxu0 0
        %1533 = vmatmul.mubr.bf16.gmra.mrb[0].mxu0 %v1384
        %v1534 = vpop.f32.mrb[0].mxu0
        %v1535 = vadd.f32 %v1332, %v1534
        %v1536 = vpop.f32.mrb[0].mxu0
        %v1537 = vpop.f32.mrb[0].mxu0
        %v1538 = vadd.f32 %v1332, %v1537
        %v1539 = vpop.f32.mrb[0].mxu0
        %1540 = vmatprep.mubr.bf16.mxu0 0
        %1541 = vmatmul.mubr.bf16.gmra.mrb[0].mxu0 %v1387
        %v1542 = vpop.f32.mrb[0].mxu0
        %v1543 = vadd.f32 %v1332, %v1542
        %v1544 = vpop.f32.mrb[0].mxu0
        %v1545 = vpop.f32.mrb[0].mxu0
        %v1546 = vadd.f32 %v1332, %v1545
        %v1547 = vpop.f32.mrb[0].mxu0
        %1548 = vmatprep.mubr.bf16.mxu0 0
        %1549 = vmatmul.mubr.bf16.gmra.mrb[0].mxu0 %v1390
        %v1550 = vpop.f32.mrb[0].mxu0
        %v1551 = vadd.f32 %v1332, %v1550
        %v1552 = vpop.f32.mrb[0].mxu0
        %v1553 = vpop.f32.mrb[0].mxu0
        %v1554 = vadd.f32 %v1332, %v1553
        %v1555 = vpop.f32.mrb[0].mxu0
        %1556 = vdwg.mxu0
        %v1557 = vmax.f32 %v1431, 0.0
        %v1558 = vmax.f32 %v1434, 0.0
        %v1559 = vmax.f32 %v1439, 0.0
        %v1560 = vmax.f32 %v1442, 0.0
        %v1561 = vmax.f32 %v1447, 0.0
        %v1562 = vmax.f32 %v1450, 0.0
        %v1563 = vmax.f32 %v1455, 0.0
        %v1564 = vmax.f32 %v1458, 0.0
        %v1565 = vmax.f32 %v1463, 0.0
        %v1566 = vmax.f32 %v1466, 0.0
        %v1567 = vmax.f32 %v1471, 0.0
        %v1568 = vmax.f32 %v1474, 0.0
        %v1569 = vmax.f32 %v1479, 0.0
        %v1570 = vmax.f32 %v1482, 0.0
        %v1571 = vmax.f32 %v1487, 0.0
        %v1572 = vmax.f32 %v1490, 0.0
        %v1573 = vmax.f32 %v1495, 0.0
        %v1574 = vmax.f32 %v1498, 0.0
        %v1575 = vmax.f32 %v1503, 0.0
        %v1576 = vmax.f32 %v1506, 0.0
        %v1577 = vmax.f32 %v1511, 0.0
        %v1578 = vmax.f32 %v1514, 0.0
        %v1579 = vmax.f32 %v1519, 0.0
        %v1580 = vmax.f32 %v1522, 0.0
        %v1581 = vmax.f32 %v1527, 0.0
        %v1582 = vmax.f32 %v1530, 0.0
        %v1583 = vmax.f32 %v1535, 0.0
        %v1584 = vmax.f32 %v1538, 0.0
        %v1585 = vmax.f32 %v1543, 0.0
        %v1586 = vmax.f32 %v1546, 0.0
        %v1587 = vmax.f32 %v1551, 0.0
        %v1588 = vmax.f32 %v1554, 0.0
        %v1589 = vpack.c.bf16 %v1558, %v1557
        %v1590 = vpack.c.bf16 %v1560, %v1559
        %v1591 = vpack.c.bf16 %v1562, %v1561
        %v1592 = vpack.c.bf16 %v1564, %v1563
        %v1593 = vpack.c.bf16 %v1566, %v1565
        %v1594 = vpack.c.bf16 %v1568, %v1567
        %v1595 = vpack.c.bf16 %v1570, %v1569
        %v1596 = vpack.c.bf16 %v1572, %v1571
        %v1597 = vpack.c.bf16 %v1574, %v1573
        %v1598 = vpack.c.bf16 %v1576, %v1575
        %v1599 = vpack.c.bf16 %v1578, %v1577
        %v1600 = vpack.c.bf16 %v1580, %v1579
        %v1601 = vpack.c.bf16 %v1582, %v1581
        %v1602 = vpack.c.bf16 %v1584, %v1583
        %v1603 = vpack.c.bf16 %v1586, %v1585
        %v1604 = vpack.c.bf16 %v1588, %v1587
        %v1606 = vlaneseq
        %v1607 = vshrl.u32 %v1606, 7
        %v1608 = vsub.s32 0, %v1607
        %v1609 = vrot.slane %v458, %v1608
        %vm1611 = vcmask 64512
        %v1613 = vsel %vm1611, %v1589, 0
        %v1616 = vsel %vm1611, %v1590, 0
        %v1619 = vsel %vm1611, %v1591, 0
        %v1622 = vsel %vm1611, %v1592, 0
        %v1625 = vsel %vm1611, %v1593, 0
        %v1628 = vsel %vm1611, %v1594, 0
        %v1631 = vsel %vm1611, %v1595, 0
        %v1634 = vsel %vm1611, %v1596, 0
        %v1637 = vsel %vm1611, %v1597, 0
        %v1640 = vsel %vm1611, %v1598, 0
        %v1643 = vsel %vm1611, %v1599, 0
        %v1646 = vsel %vm1611, %v1600, 0
        %v1649 = vsel %vm1611, %v1601, 0
        %v1652 = vsel %vm1611, %v1602, 0
        %v1655 = vsel %vm1611, %v1603, 0
        %v1658 = vsel %vm1611, %v1604, 0
        %v1661 = vsel %vm1392, %v452, 0
        %1663 = vmatprep.subr.bf16.mxu0 0
        %1664 = vmatpush1.bf16.msra.mxu0 %v1661
        %1665 = vmatprep.subr.bf16.mxu0 0
        %1666 = vmatpush1.bf16.msra.mxu0 0
        %1667 = vmatprep.subr.bf16.mxu0 0
        %1668 = vmatpush1.bf16.msra.mxu0 0
        %1669 = vmatprep.subr.bf16.mxu0 0
        %1670 = vmatpush1.bf16.msra.mxu0 0
        %1671 = vmatprep.subr.bf16.mxu0 0
        %1672 = vmatpush1.bf16.msra.mxu0 0
        %1673 = vmatprep.subr.bf16.mxu0 0
        %1674 = vmatpush1.bf16.msra.mxu0 0
        %1675 = vmatprep.subr.bf16.mxu0 0
        %1676 = vmatpush1.bf16.msra.mxu0 0
        %1677 = vmatprep.subr.bf16.mxu0 0
        %1678 = vmatpush1.bf16.msra.mxu0 0
        %1679 = vmatprep.subr.bf16.mxu0 0
        %1680 = vmatpush1.bf16.msra.mxu0 0
        %1681 = vmatprep.subr.bf16.mxu0 0
        %1682 = vmatpush1.bf16.msra.mxu0 0
        %1683 = vmatprep.subr.bf16.mxu0 0
        %1684 = vmatpush1.bf16.msra.mxu0 0
        %1685 = vmatprep.subr.bf16.mxu0 0
        %1686 = vmatpush1.bf16.msra.mxu0 0
        %1687 = vmatprep.subr.bf16.mxu0 0
        %1688 = vmatpush1.bf16.msra.mxu0 0
        %1689 = vmatprep.subr.bf16.mxu0 0
        %1690 = vmatpush1.bf16.msra.mxu0 0
        %1691 = vmatprep.subr.bf16.mxu0 0
        %1692 = vmatpush1.bf16.msra.mxu0 0
        %1693 = vmatprep.subr.bf16.mxu0 0
        %1694 = vmatpush1.bf16.msra.mxu0 0
        %1695 = vmatprep.mubr.bf16.mxu0 0
        %1696 = vmatmul.mubr.bf16.gmra.mrb[0].mxu0 %v1613
        %v1697 = vpop.f32.mrb[0].mxu0
        %v1698 = vadd.f32 %v1609, %v1697
        %v1699 = vpop.f32.mrb[0].mxu0
        %v1700 = vpop.f32.mrb[0].mxu0
        %v1701 = vadd.f32 %v1609, %v1700
        %v1702 = vpop.f32.mrb[0].mxu0
        %1703 = vmatprep.mubr.bf16.mxu0 0
        %1704 = vmatmul.mubr.bf16.gmra.mrb[0].mxu0 %v1616
        %v1705 = vpop.f32.mrb[0].mxu0
        %v1706 = vadd.f32 %v1609, %v1705
        %v1707 = vpop.f32.mrb[0].mxu0
        %v1708 = vpop.f32.mrb[0].mxu0
        %v1709 = vadd.f32 %v1609, %v1708
        %v1710 = vpop.f32.mrb[0].mxu0
        %1711 = vmatprep.mubr.bf16.mxu0 0
        %1712 = vmatmul.mubr.bf16.gmra.mrb[0].mxu0 %v1619
        %v1713 = vpop.f32.mrb[0].mxu0
        %v1714 = vadd.f32 %v1609, %v1713
        %v1715 = vpop.f32.mrb[0].mxu0
        %v1716 = vpop.f32.mrb[0].mxu0
        %v1717 = vadd.f32 %v1609, %v1716
        %v1718 = vpop.f32.mrb[0].mxu0
        %1719 = vmatprep.mubr.bf16.mxu0 0
        %1720 = vmatmul.mubr.bf16.gmra.mrb[0].mxu0 %v1622
        %v1721 = vpop.f32.mrb[0].mxu0
        %v1722 = vadd.f32 %v1609, %v1721
        %v1723 = vpop.f32.mrb[0].mxu0
        %v1724 = vpop.f32.mrb[0].mxu0
        %v1725 = vadd.f32 %v1609, %v1724
        %v1726 = vpop.f32.mrb[0].mxu0
        %1727 = vmatprep.mubr.bf16.mxu0 0
        %1728 = vmatmul.mubr.bf16.gmra.mrb[0].mxu0 %v1625
        %v1729 = vpop.f32.mrb[0].mxu0
        %v1730 = vadd.f32 %v1609, %v1729
        %v1731 = vpop.f32.mrb[0].mxu0
        %v1732 = vpop.f32.mrb[0].mxu0
        %v1733 = vadd.f32 %v1609, %v1732
        %v1734 = vpop.f32.mrb[0].mxu0
        %1735 = vmatprep.mubr.bf16.mxu0 0
        %1736 = vmatmul.mubr.bf16.gmra.mrb[0].mxu0 %v1628
        %v1737 = vpop.f32.mrb[0].mxu0
        %v1738 = vadd.f32 %v1609, %v1737
        %v1739 = vpop.f32.mrb[0].mxu0
        %v1740 = vpop.f32.mrb[0].mxu0
        %v1741 = vadd.f32 %v1609, %v1740
        %v1742 = vpop.f32.mrb[0].mxu0
        %1743 = vmatprep.mubr.bf16.mxu0 0
        %1744 = vmatmul.mubr.bf16.gmra.mrb[0].mxu0 %v1631
        %v1745 = vpop.f32.mrb[0].mxu0
        %v1746 = vadd.f32 %v1609, %v1745
        %v1747 = vpop.f32.mrb[0].mxu0
        %v1748 = vpop.f32.mrb[0].mxu0
        %v1749 = vadd.f32 %v1609, %v1748
        %v1750 = vpop.f32.mrb[0].mxu0
        %1751 = vmatprep.mubr.bf16.mxu0 0
        %1752 = vmatmul.mubr.bf16.gmra.mrb[0].mxu0 %v1634
        %v1753 = vpop.f32.mrb[0].mxu0
        %v1754 = vadd.f32 %v1609, %v1753
        %v1755 = vpop.f32.mrb[0].mxu0
        %v1756 = vpop.f32.mrb[0].mxu0
        %v1757 = vadd.f32 %v1609, %v1756
        %v1758 = vpop.f32.mrb[0].mxu0
        %1759 = vmatprep.mubr.bf16.mxu0 0
        %1760 = vmatmul.mubr.bf16.gmra.mrb[0].mxu0 %v1637
        %v1761 = vpop.f32.mrb[0].mxu0
        %v1762 = vadd.f32 %v1609, %v1761
        %v1763 = vpop.f32.mrb[0].mxu0
        %v1764 = vpop.f32.mrb[0].mxu0
        %v1765 = vadd.f32 %v1609, %v1764
        %v1766 = vpop.f32.mrb[0].mxu0
        %1767 = vmatprep.mubr.bf16.mxu0 0
        %1768 = vmatmul.mubr.bf16.gmra.mrb[0].mxu0 %v1640
        %v1769 = vpop.f32.mrb[0].mxu0
        %v1770 = vadd.f32 %v1609, %v1769
        %v1771 = vpop.f32.mrb[0].mxu0
        %v1772 = vpop.f32.mrb[0].mxu0
        %v1773 = vadd.f32 %v1609, %v1772
        %v1774 = vpop.f32.mrb[0].mxu0
        %1775 = vmatprep.mubr.bf16.mxu0 0
        %1776 = vmatmul.mubr.bf16.gmra.mrb[0].mxu0 %v1643
        %v1777 = vpop.f32.mrb[0].mxu0
        %v1778 = vadd.f32 %v1609, %v1777
        %v1779 = vpop.f32.mrb[0].mxu0
        %v1780 = vpop.f32.mrb[0].mxu0
        %v1781 = vadd.f32 %v1609, %v1780
        %v1782 = vpop.f32.mrb[0].mxu0
        %1783 = vmatprep.mubr.bf16.mxu0 0
        %1784 = vmatmul.mubr.bf16.gmra.mrb[0].mxu0 %v1646
        %v1785 = vpop.f32.mrb[0].mxu0
        %v1786 = vadd.f32 %v1609, %v1785
        %v1787 = vpop.f32.mrb[0].mxu0
        %v1788 = vpop.f32.mrb[0].mxu0
        %v1789 = vadd.f32 %v1609, %v1788
        %v1790 = vpop.f32.mrb[0].mxu0
        %1791 = vmatprep.mubr.bf16.mxu0 0
        %1792 = vmatmul.mubr.bf16.gmra.mrb[0].mxu0 %v1649
        %v1793 = vpop.f32.mrb[0].mxu0
        %v1794 = vadd.f32 %v1609, %v1793
        %v1795 = vpop.f32.mrb[0].mxu0
        %v1796 = vpop.f32.mrb[0].mxu0
        %v1797 = vadd.f32 %v1609, %v1796
        %v1798 = vpop.f32.mrb[0].mxu0
        %1799 = vmatprep.mubr.bf16.mxu0 0
        %1800 = vmatmul.mubr.bf16.gmra.mrb[0].mxu0 %v1652
        %v1801 = vpop.f32.mrb[0].mxu0
        %v1802 = vadd.f32 %v1609, %v1801
        %v1803 = vpop.f32.mrb[0].mxu0
        %v1804 = vpop.f32.mrb[0].mxu0
        %v1805 = vadd.f32 %v1609, %v1804
        %v1806 = vpop.f32.mrb[0].mxu0
        %1807 = vmatprep.mubr.bf16.mxu0 0
        %1808 = vmatmul.mubr.bf16.gmra.mrb[0].mxu0 %v1655
        %v1809 = vpop.f32.mrb[0].mxu0
        %v1810 = vadd.f32 %v1609, %v1809
        %v1811 = vpop.f32.mrb[0].mxu0
        %v1812 = vpop.f32.mrb[0].mxu0
        %v1813 = vadd.f32 %v1609, %v1812
        %v1814 = vpop.f32.mrb[0].mxu0
        %1815 = vmatprep.mubr.bf16.mxu0 0
        %1816 = vmatmul.mubr.bf16.gmra.mrb[0].mxu0 %v1658
        %v1817 = vpop.f32.mrb[0].mxu0
        %v1818 = vadd.f32 %v1609, %v1817
        %v1819 = vpop.f32.mrb[0].mxu0
        %v1820 = vpop.f32.mrb[0].mxu0
        %v1821 = vadd.f32 %v1609, %v1820
        %v1822 = vpop.f32.mrb[0].mxu0
        %1823 = vdwg.mxu0
        %v1824 = vmax.f32 %v1698, 0.0
        %v1825 = vmax.f32 %v1701, 0.0
        %v1826 = vmax.f32 %v1706, 0.0
        %v1827 = vmax.f32 %v1709, 0.0
        %v1828 = vmax.f32 %v1714, 0.0
        %v1829 = vmax.f32 %v1717, 0.0
        %v1830 = vmax.f32 %v1722, 0.0
        %v1831 = vmax.f32 %v1725, 0.0
        %v1832 = vmax.f32 %v1730, 0.0
        %v1833 = vmax.f32 %v1733, 0.0
        %v1834 = vmax.f32 %v1738, 0.0
        %v1835 = vmax.f32 %v1741, 0.0
        %v1836 = vmax.f32 %v1746, 0.0
        %v1837 = vmax.f32 %v1749, 0.0
        %v1838 = vmax.f32 %v1754, 0.0
        %v1839 = vmax.f32 %v1757, 0.0
        %v1840 = vmax.f32 %v1762, 0.0
        %v1841 = vmax.f32 %v1765, 0.0
        %v1842 = vmax.f32 %v1770, 0.0
        %v1843 = vmax.f32 %v1773, 0.0
        %v1844 = vmax.f32 %v1778, 0.0
        %v1845 = vmax.f32 %v1781, 0.0
        %v1846 = vmax.f32 %v1786, 0.0
        %v1847 = vmax.f32 %v1789, 0.0
        %v1848 = vmax.f32 %v1794, 0.0
        %v1849 = vmax.f32 %v1797, 0.0
        %v1850 = vmax.f32 %v1802, 0.0
        %v1851 = vmax.f32 %v1805, 0.0
        %v1852 = vmax.f32 %v1810, 0.0
        %v1853 = vmax.f32 %v1813, 0.0
        %v1854 = vmax.f32 %v1818, 0.0
        %v1855 = vmax.f32 %v1821, 0.0
        %v1856 = vpack.c.bf16 %v1825, %v1824
        %v1857 = vpack.c.bf16 %v1827, %v1826
        %v1858 = vpack.c.bf16 %v1829, %v1828
        %v1859 = vpack.c.bf16 %v1831, %v1830
        %v1860 = vpack.c.bf16 %v1833, %v1832
        %v1861 = vpack.c.bf16 %v1835, %v1834
        %v1862 = vpack.c.bf16 %v1837, %v1836
        %v1863 = vpack.c.bf16 %v1839, %v1838
        %v1864 = vpack.c.bf16 %v1841, %v1840
        %v1865 = vpack.c.bf16 %v1843, %v1842
        %v1866 = vpack.c.bf16 %v1845, %v1844
        %v1867 = vpack.c.bf16 %v1847, %v1846
        %v1868 = vpack.c.bf16 %v1849, %v1848
        %v1869 = vpack.c.bf16 %v1851, %v1850
        %v1870 = vpack.c.bf16 %v1853, %v1852
        %v1871 = vpack.c.bf16 %v1855, %v1854
        %v1873 = vlaneseq
        %v1874 = vshrl.u32 %v1873, 7
        %v1875 = vsub.s32 0, %v1874
        %v1876 = vrot.slane %v459, %v1875
        %vm1878 = vcmask 31744
        %v1880 = vsel %vm1878, %v1856, 0
        %v1883 = vsel %vm1878, %v1857, 0
        %v1886 = vsel %vm1878, %v1858, 0
        %v1889 = vsel %vm1878, %v1859, 0
        %v1892 = vsel %vm1878, %v1860, 0
        %v1895 = vsel %vm1878, %v1861, 0
        %v1898 = vsel %vm1878, %v1862, 0
        %v1901 = vsel %vm1878, %v1863, 0
        %v1904 = vsel %vm1878, %v1864, 0
        %v1907 = vsel %vm1878, %v1865, 0
        %v1910 = vsel %vm1878, %v1866, 0
        %v1913 = vsel %vm1878, %v1867, 0
        %v1916 = vsel %vm1878, %v1868, 0
        %v1919 = vsel %vm1878, %v1869, 0
        %v1922 = vsel %vm1878, %v1870, 0
        %v1925 = vsel %vm1878, %v1871, 0
        %v1928 = vsel %vm572, %v453, 0
        %1930 = vmatprep.subr.bf16.mxu0 0
        %1931 = vmatpush1.bf16.msra.mxu0 %v1928
        %1932 = vmatprep.subr.bf16.mxu0 0
        %1933 = vmatpush1.bf16.msra.mxu0 0
        %1934 = vmatprep.subr.bf16.mxu0 0
        %1935 = vmatpush1.bf16.msra.mxu0 0
        %1936 = vmatprep.subr.bf16.mxu0 0
        %1937 = vmatpush1.bf16.msra.mxu0 0
        %1938 = vmatprep.subr.bf16.mxu0 0
        %1939 = vmatpush1.bf16.msra.mxu0 0
        %1940 = vmatprep.subr.bf16.mxu0 0
        %1941 = vmatpush1.bf16.msra.mxu0 0
        %1942 = vmatprep.subr.bf16.mxu0 0
        %1943 = vmatpush1.bf16.msra.mxu0 0
        %1944 = vmatprep.subr.bf16.mxu0 0
        %1945 = vmatpush1.bf16.msra.mxu0 0
        %1946 = vmatprep.subr.bf16.mxu0 0
        %1947 = vmatpush1.bf16.msra.mxu0 0
        %1948 = vmatprep.subr.bf16.mxu0 0
        %1949 = vmatpush1.bf16.msra.mxu0 0
        %1950 = vmatprep.subr.bf16.mxu0 0
        %1951 = vmatpush1.bf16.msra.mxu0 0
        %1952 = vmatprep.subr.bf16.mxu0 0
        %1953 = vmatpush1.bf16.msra.mxu0 0
        %1954 = vmatprep.subr.bf16.mxu0 0
        %1955 = vmatpush1.bf16.msra.mxu0 0
        %1956 = vmatprep.subr.bf16.mxu0 0
        %1957 = vmatpush1.bf16.msra.mxu0 0
        %1958 = vmatprep.subr.bf16.mxu0 0
        %1959 = vmatpush1.bf16.msra.mxu0 0
        %1960 = vmatprep.subr.bf16.mxu0 0
        %1961 = vmatpush1.bf16.msra.mxu0 0
        %1962 = vmatprep.mubr.bf16.mxu0 0
        %1963 = vmatmul.mubr.bf16.gmra.mrb[0].mxu0 %v1880
        %v1964 = vpop.f32.mrb[0].mxu0
        %v1965 = vadd.f32 %v1876, %v1964
        %v1966 = vpop.f32.mrb[0].mxu0
        %v1967 = vpop.f32.mrb[0].mxu0
        %v1968 = vadd.f32 %v1876, %v1967
        %v1969 = vpop.f32.mrb[0].mxu0
        %1970 = vmatprep.mubr.bf16.mxu0 0
        %1971 = vmatmul.mubr.bf16.gmra.mrb[0].mxu0 %v1883
        %v1972 = vpop.f32.mrb[0].mxu0
        %v1973 = vadd.f32 %v1876, %v1972
        %v1974 = vpop.f32.mrb[0].mxu0
        %v1975 = vpop.f32.mrb[0].mxu0
        %v1976 = vadd.f32 %v1876, %v1975
        %v1977 = vpop.f32.mrb[0].mxu0
        %1978 = vmatprep.mubr.bf16.mxu0 0
        %1979 = vmatmul.mubr.bf16.gmra.mrb[0].mxu0 %v1886
        %v1980 = vpop.f32.mrb[0].mxu0
        %v1981 = vadd.f32 %v1876, %v1980
        %v1982 = vpop.f32.mrb[0].mxu0
        %v1983 = vpop.f32.mrb[0].mxu0
        %v1984 = vadd.f32 %v1876, %v1983
        %v1985 = vpop.f32.mrb[0].mxu0
        %1986 = vmatprep.mubr.bf16.mxu0 0
        %1987 = vmatmul.mubr.bf16.gmra.mrb[0].mxu0 %v1889
        %v1988 = vpop.f32.mrb[0].mxu0
        %v1989 = vadd.f32 %v1876, %v1988
        %v1990 = vpop.f32.mrb[0].mxu0
        %v1991 = vpop.f32.mrb[0].mxu0
        %v1992 = vadd.f32 %v1876, %v1991
        %v1993 = vpop.f32.mrb[0].mxu0
        %1994 = vmatprep.mubr.bf16.mxu0 0
        %1995 = vmatmul.mubr.bf16.gmra.mrb[0].mxu0 %v1892
        %v1996 = vpop.f32.mrb[0].mxu0
        %v1997 = vadd.f32 %v1876, %v1996
        %v1998 = vpop.f32.mrb[0].mxu0
        %v1999 = vpop.f32.mrb[0].mxu0
        %v2000 = vadd.f32 %v1876, %v1999
        %v2001 = vpop.f32.mrb[0].mxu0
        %2002 = vmatprep.mubr.bf16.mxu0 0
        %2003 = vmatmul.mubr.bf16.gmra.mrb[0].mxu0 %v1895
        %v2004 = vpop.f32.mrb[0].mxu0
        %v2005 = vadd.f32 %v1876, %v2004
        %v2006 = vpop.f32.mrb[0].mxu0
        %v2007 = vpop.f32.mrb[0].mxu0
        %v2008 = vadd.f32 %v1876, %v2007
        %v2009 = vpop.f32.mrb[0].mxu0
        %2010 = vmatprep.mubr.bf16.mxu0 0
        %2011 = vmatmul.mubr.bf16.gmra.mrb[0].mxu0 %v1898
        %v2012 = vpop.f32.mrb[0].mxu0
        %v2013 = vadd.f32 %v1876, %v2012
        %v2014 = vpop.f32.mrb[0].mxu0
        %v2015 = vpop.f32.mrb[0].mxu0
        %v2016 = vadd.f32 %v1876, %v2015
        %v2017 = vpop.f32.mrb[0].mxu0
        %2018 = vmatprep.mubr.bf16.mxu0 0
        %2019 = vmatmul.mubr.bf16.gmra.mrb[0].mxu0 %v1901
        %v2020 = vpop.f32.mrb[0].mxu0
        %v2021 = vadd.f32 %v1876, %v2020
        %v2022 = vpop.f32.mrb[0].mxu0
        %v2023 = vpop.f32.mrb[0].mxu0
        %v2024 = vadd.f32 %v1876, %v2023
        %v2025 = vpop.f32.mrb[0].mxu0
        %2026 = vmatprep.mubr.bf16.mxu0 0
        %2027 = vmatmul.mubr.bf16.gmra.mrb[0].mxu0 %v1904
        %v2028 = vpop.f32.mrb[0].mxu0
        %v2029 = vadd.f32 %v1876, %v2028
        %v2030 = vpop.f32.mrb[0].mxu0
        %v2031 = vpop.f32.mrb[0].mxu0
        %v2032 = vadd.f32 %v1876, %v2031
        %v2033 = vpop.f32.mrb[0].mxu0
        %2034 = vmatprep.mubr.bf16.mxu0 0
        %2035 = vmatmul.mubr.bf16.gmra.mrb[0].mxu0 %v1907
        %v2036 = vpop.f32.mrb[0].mxu0
        %v2037 = vadd.f32 %v1876, %v2036
        %v2038 = vpop.f32.mrb[0].mxu0
        %v2039 = vpop.f32.mrb[0].mxu0
        %v2040 = vadd.f32 %v1876, %v2039
        %v2041 = vpop.f32.mrb[0].mxu0
        %2042 = vmatprep.mubr.bf16.mxu0 0
        %2043 = vmatmul.mubr.bf16.gmra.mrb[0].mxu0 %v1910
        %v2044 = vpop.f32.mrb[0].mxu0
        %v2045 = vadd.f32 %v1876, %v2044
        %v2046 = vpop.f32.mrb[0].mxu0
        %v2047 = vpop.f32.mrb[0].mxu0
        %v2048 = vadd.f32 %v1876, %v2047
        %v2049 = vpop.f32.mrb[0].mxu0
        %2050 = vmatprep.mubr.bf16.mxu0 0
        %2051 = vmatmul.mubr.bf16.gmra.mrb[0].mxu0 %v1913
        %v2052 = vpop.f32.mrb[0].mxu0
        %v2053 = vadd.f32 %v1876, %v2052
        %v2054 = vpop.f32.mrb[0].mxu0
        %v2055 = vpop.f32.mrb[0].mxu0
        %v2056 = vadd.f32 %v1876, %v2055
        %v2057 = vpop.f32.mrb[0].mxu0
        %2058 = vmatprep.mubr.bf16.mxu0 0
        %2059 = vmatmul.mubr.bf16.gmra.mrb[0].mxu0 %v1916
        %v2060 = vpop.f32.mrb[0].mxu0
        %v2061 = vadd.f32 %v1876, %v2060
        %v2062 = vpop.f32.mrb[0].mxu0
        %v2063 = vpop.f32.mrb[0].mxu0
        %v2064 = vadd.f32 %v1876, %v2063
        %v2065 = vpop.f32.mrb[0].mxu0
        %2066 = vmatprep.mubr.bf16.mxu0 0
        %2067 = vmatmul.mubr.bf16.gmra.mrb[0].mxu0 %v1919
        %v2068 = vpop.f32.mrb[0].mxu0
        %v2069 = vadd.f32 %v1876, %v2068
        %v2070 = vpop.f32.mrb[0].mxu0
        %v2071 = vpop.f32.mrb[0].mxu0
        %v2072 = vadd.f32 %v1876, %v2071
        %v2073 = vpop.f32.mrb[0].mxu0
        %2074 = vmatprep.mubr.bf16.mxu0 0
        %2075 = vmatmul.mubr.bf16.gmra.mrb[0].mxu0 %v1922
        %v2076 = vpop.f32.mrb[0].mxu0
        %v2077 = vadd.f32 %v1876, %v2076
        %v2078 = vpop.f32.mrb[0].mxu0
        %v2079 = vpop.f32.mrb[0].mxu0
        %v2080 = vadd.f32 %v1876, %v2079
        %v2081 = vpop.f32.mrb[0].mxu0
        %2082 = vmatprep.mubr.bf16.mxu0 0
        %2083 = vmatmul.mubr.bf16.gmra.mrb[0].mxu0 %v1925
        %v2084 = vpop.f32.mrb[0].mxu0
        %v2085 = vadd.f32 %v1876, %v2084
        %v2086 = vpop.f32.mrb[0].mxu0
        %v2087 = vpop.f32.mrb[0].mxu0
        %v2088 = vadd.f32 %v1876, %v2087
        %v2089 = vpop.f32.mrb[0].mxu0
        %2090 = vdwg.mxu0
        %s2091 = scalar_lea.vmem %s442, %s466
        %vm2092 = vcmask 15360
        %2093 = vst.msk [vmem:[%s2091] sm:$0xff] %vm2092, %v1965
        %2094 = vst.msk [vmem:[%s2091 + $0x8] sm:$0xff] %vm2092, %v1968
        %2095 = vst.msk [vmem:[%s2091 + $0x10] sm:$0xff] %vm2092, %v1973
        %2096 = vst.msk [vmem:[%s2091 + $0x18] sm:$0xff] %vm2092, %v1976
        %2097 = vst.msk [vmem:[%s2091 + $0x20] sm:$0xff] %vm2092, %v1981
        %2098 = vst.msk [vmem:[%s2091 + $0x28] sm:$0xff] %vm2092, %v1984
        %2099 = vst.msk [vmem:[%s2091 + $0x30] sm:$0xff] %vm2092, %v1989
        %2100 = vst.msk [vmem:[%s2091 + $0x38] sm:$0xff] %vm2092, %v1992
        %2101 = vst.msk [vmem:[%s2091 + $0x40] sm:$0xff] %vm2092, %v1997
        %2102 = vst.msk [vmem:[%s2091 + $0x48] sm:$0xff] %vm2092, %v2000
        %2103 = vst.msk [vmem:[%s2091 + $0x50] sm:$0xff] %vm2092, %v2005
        %2104 = vst.msk [vmem:[%s2091 + $0x58] sm:$0xff] %vm2092, %v2008
        %2105 = vst.msk [vmem:[%s2091 + $0x60] sm:$0xff] %vm2092, %v2013
        %2106 = vst.msk [vmem:[%s2091 + $0x68] sm:$0xff] %vm2092, %v2016
        %2107 = vst.msk [vmem:[%s2091 + $0x70] sm:$0xff] %vm2092, %v2021
        %2108 = vst.msk [vmem:[%s2091 + $0x78] sm:$0xff] %vm2092, %v2024
        %2109 = vst.msk [vmem:[%s2091 + $0x80] sm:$0xff] %vm2092, %v2029
        %2110 = vst.msk [vmem:[%s2091 + $0x88] sm:$0xff] %vm2092, %v2032
        %2111 = vst.msk [vmem:[%s2091 + $0x90] sm:$0xff] %vm2092, %v2037
        %2112 = vst.msk [vmem:[%s2091 + $0x98] sm:$0xff] %vm2092, %v2040
        %2113 = vst.msk [vmem:[%s2091 + $0xa0] sm:$0xff] %vm2092, %v2045
        %2114 = vst.msk [vmem:[%s2091 + $0xa8] sm:$0xff] %vm2092, %v2048
        %2115 = vst.msk [vmem:[%s2091 + $0xb0] sm:$0xff] %vm2092, %v2053
        %2116 = vst.msk [vmem:[%s2091 + $0xb8] sm:$0xff] %vm2092, %v2056
        %2117 = vst.msk [vmem:[%s2091 + $0xc0] sm:$0xff] %vm2092, %v2061
        %2118 = vst.msk [vmem:[%s2091 + $0xc8] sm:$0xff] %vm2092, %v2064
        %2119 = vst.msk [vmem:[%s2091 + $0xd0] sm:$0xff] %vm2092, %v2069
        %2120 = vst.msk [vmem:[%s2091 + $0xd8] sm:$0xff] %vm2092, %v2072
        %2121 = vst.msk [vmem:[%s2091 + $0xe0] sm:$0xff] %vm2092, %v2077
        %2122 = vst.msk [vmem:[%s2091 + $0xe8] sm:$0xff] %vm2092, %v2080
        %2123 = vst.msk [vmem:[%s2091 + $0xf0] sm:$0xff] %vm2092, %v2085
        %2124 = vst.msk [vmem:[%s2091 + $0xf8] sm:$0xff] %vm2092, %v2088
      $region77: #{tpu_custom_call.1} parent=71 // loop_footer
        %s465 = sadd.s32 1, %s461
      $region78: #{tpu_custom_call.1} parent=71 // loop_footer_branch
        %460 = sbr.rel target = $region74
      $region79: #{tpu_custom_call.1} parent=71 // loop_exit
        _
      %s2125 = smul.u32 64, %s24
      %p2126 = scmp.lt.s32.totalorder %s2125, 127
      %s2127 = scalar_select %p2126, %s2125, 127
      %s2128 = smul.addr %s2127, 8
      %s2129 = scalar_lea.vmem %s13, %s2128
      // Predicated region
      $region80: #{tpu_custom_call.1} parent=71 // pred_check
        %p2130 = pneg %p320
      $region81: #{tpu_custom_call.1} parent=71 // pred_check_branch
        %2132 = sbr.rel (%p2130) target = $region83
      $region82: #{tpu_custom_call.1} parent=71 // pred_region
        %s2133 = smul.u32 64, %s24
      $region83: #{tpu_custom_call.1} parent=71 // pred_fallthru
        _
    $region72: #{tpu_custom_call.1} parent=5 // pred_fallthru
      _
    %p2134 = scmp.le.s32.totalorder 2, %s19
    // Predicated region
    $region84: #{tpu_custom_call.1} parent=5 // pred_check
      %p2135 = pneg %p2134
    $region85: #{tpu_custom_call.1} parent=5 // pred_check_branch
      %2137 = sbr.rel (%p2135) target = $region87
    $region86: #{tpu_custom_call.1} parent=5 // pred_region
      %s2138 = ssub.s32 %s19, 2
      // Predicated region
      $region88: #{tpu_custom_call.1} parent=86 // pred_check
        %p2139 = pneg %p326
      $region89: #{tpu_custom_call.1} parent=86 // pred_check_branch
        %2141 = sbr.rel (%p2139) target = $region91
      $region90: #{tpu_custom_call.1} parent=86 // pred_region
        %s2142 = smul.u32 64, %s25
        %p2143 = scmp.lt.s32.totalorder %s2142, 127
        %s2144 = scalar_select %p2143, %s2142, 127
        %s2145 = smul.addr %s2144, 8
        %s2146 = scalar_lea.vmem %s13, %s2145
      $region91: #{tpu_custom_call.1} parent=86 // pred_fallthru
        _
    $region87: #{tpu_custom_call.1} parent=5 // pred_fallthru
      _
  $region6: #{tpu_custom_call.1} parent=0 // loop_footer
    %s23 = sadd.s32 1, %s19
  $region7: #{tpu_custom_call.1} parent=0 // loop_footer_branch
    %18 = sbr.rel target = $region3
  $region8: #{tpu_custom_call.1} parent=0 // loop_exit
    _

</llo_original>
